<compile_context>
chip_gen: v7x
topology: tpu7x:2x2x1
jax: 0.10.0
libtpu: 0.0.40
codegen_flags: <defaults>
</compile_context>

<pallas_src>
import functools
import numpy as np
import jax
import jax.numpy as jnp
from jax import lax
from jax.experimental import pallas as pl
from jax.experimental.pallas import tpu as pltpu

_BN_EPS = 1e-5


# ----------------------------- Pallas kernels ----------------------------- #

def _conv_pool_kernel(x_ref,
                      w1_ref, t1_ref, w2_ref, t2_ref, w3_ref, t3_ref,
                      w4_ref, t4_ref, w5_ref, t5_ref,
                      pool_ref, *, n_points, tile_n, needs_mask):
    """conv1..conv5 (+folded BN +ReLU), running global max pool over points.

    x_ref    : (1, 3, tile_n)  bf16, points on lanes
    wK_ref   : (C_out, C_in)   bf16, BN-scale folded
    tK_ref   : (C_out, 1)      f32,  BN additive shift
    pool_ref : (1, E, 1)       f32 output block, revisited across the point
                               tile axis -> acts as the max-pool accumulator.
    """
    j = pl.program_id(1)

    @pl.when(j == 0)
    def _init():
        pool_ref[...] = jnp.full(pool_ref.shape, -jnp.inf, pool_ref.dtype)

    def layer(h_bf16, w_ref, t_ref):
        acc = jnp.dot(w_ref[...], h_bf16, preferred_element_type=jnp.float32)
        return jnp.maximum(acc + t_ref[...], 0.0)           # f32 (C_out, tile_n)

    h = x_ref[0]                                             # (3, tile_n) bf16
    h = layer(h, w1_ref, t1_ref).astype(jnp.bfloat16)
    h = layer(h, w2_ref, t2_ref).astype(jnp.bfloat16)
    h = layer(h, w3_ref, t3_ref).astype(jnp.bfloat16)
    h = layer(h, w4_ref, t4_ref).astype(jnp.bfloat16)
    h = layer(h, w5_ref, t5_ref)                             # keep f32 for pool

    if needs_mask:                                           # static Python branch
        col = j * tile_n + lax.broadcasted_iota(jnp.int32, (1, tile_n), 1)
        h = jnp.where(col < n_points, h, -jnp.inf)

    cur = jnp.max(h, axis=-1, keepdims=True)                 # (E, 1) f32
    pool_ref[0] = jnp.maximum(pool_ref[0], cur)


def _head_kernel(g_ref, w6_ref, t6_ref, w7_ref, b7_ref, o_ref):
    """linear1 + folded BN6 + ReLU -> (dropout = id in eval) -> linear2 + bias."""
    g = g_ref[...]                                           # (tb, E) f32
    h = jnp.maximum(
        jnp.dot(g, w6_ref[...], preferred_element_type=jnp.float32) + t6_ref[...],
        0.0)
    o_ref[...] = (jnp.dot(h, w7_ref[...], preferred_element_type=jnp.float32)
                  + b7_ref[...])


# ------------------------------- wrappers ------------------------------- #

def _fold_conv_bn(w, bn, eps=_BN_EPS):
    """Fold inference-mode BN into a conv1d(k=1, bias=False) weight (C_out, C_in)."""
    s = bn['gamma'] / jnp.sqrt(bn['var'] + eps)              # (C_out,)
    w_eff = w * s[:, None]                                   # (C_out, C_in)
    shift = (bn['beta'] - bn['mean'] * s)[:, None]           # (C_out, 1)
    return w_eff, shift


def _choose_tile(n, block_n):
    """Point-axis tile: multiple of 128 (or the full axis for tiny N)."""
    block_n = max(128, (block_n // 128) * 128)
    if n < 128:
        return n                       # full-extent block, no padding needed
    if n % 128 == 0:
        return min(block_n, n)
    return min(block_n, (n // 128) * 128)


def pointnet_forward(params, x, *, block_n=2048):
    """x: (B, 3, N) in the PyTorch NCW layout -> (B, output_channels) logits."""
    B, C, N = x.shape
    assert C == 3

    # Fold inference-mode BatchNorm into the matmul weights at trace time.
    w1, t1 = _fold_conv_bn(params['conv1_w'], params['bn1'])
    w2, t2 = _fold_conv_bn(params['conv2_w'], params['bn2'])
    w3, t3 = _fold_conv_bn(params['conv3_w'], params['bn3'])
    w4, t4 = _fold_conv_bn(params['conv4_w'], params['bn4'])
    w5, t5 = _fold_conv_bn(params['conv5_w'], params['bn5'])

    s6 = params['bn6']['gamma'] / jnp.sqrt(params['bn6']['var'] + _BN_EPS)
    w6 = (params['linear1_w'] * s6[:, None]).T               # (E, 512)
    t6 = (params['bn6']['beta'] - params['bn6']['mean'] * s6)[None, :]
    w7 = params['linear2_w'].T                                # (512, O)
    b7 = params['linear2_b'][None, :]                         # (1, O)

    E = params['conv5_w'].shape[0]
    O = params['linear2_w'].shape[0]

    # bf16 MXU operands; shifts / accumulation / pooled output stay f32.
    xb = x.astype(jnp.bfloat16)
    w1, w2, w3, w4, w5 = (w.astype(jnp.bfloat16) for w in (w1, w2, w3, w4, w5))

    tn = _choose_tile(N, block_n)
    n_tiles = pl.cdiv(N, tn)
    needs_mask = (N % tn) != 0

    kernel = functools.partial(_conv_pool_kernel, n_points=N, tile_n=tn,
                               needs_mask=needs_mask)

    def wspec(arr):
        return pl.BlockSpec(arr.shape, lambda b, j: (0, 0))

    pooled = pl.pallas_call(
        kernel,
        out_shape=jax.ShapeDtypeStruct((B, E, 1), jnp.float32),
        grid=(B, n_tiles),
        in_specs=[
            pl.BlockSpec((1, C, tn), lambda b, j: (b, 0, j)),
            wspec(w1), wspec(t1), wspec(w2), wspec(t2), wspec(w3), wspec(t3),
            wspec(w4), wspec(t4), wspec(w5), wspec(t5),
        ],
        out_specs=pl.BlockSpec((1, E, 1), lambda b, j: (b, 0, 0)),
        compiler_params=pltpu.CompilerParams(
            dimension_semantics=("parallel", "arbitrary"),
            vmem_limit_bytes=32 * 1024 * 1024),
    )(xb, w1, t1, w2, t2, w3, t3, w4, t4, w5, t5)

    g = pooled[:, :, 0]                                       # (B, E) f32

    # MLP head: batched over B (restores MXU rows for large B); f32 compute.
    tb = B if B <= 256 else 256
    out = pl.pallas_call(
        _head_kernel,
        out_shape=jax.ShapeDtypeStruct((B, O), jnp.float32),
        grid=(pl.cdiv(B, tb),),
        in_specs=[
            pl.BlockSpec((tb, E), lambda i: (i, 0)),
            pl.BlockSpec(w6.shape, lambda i: (0, 0)),
            pl.BlockSpec(t6.shape, lambda i: (0, 0)),
            pl.BlockSpec(w7.shape, lambda i: (0, 0)),
            pl.BlockSpec(b7.shape, lambda i: (0, 0)),
        ],
        out_specs=pl.BlockSpec((tb, O), lambda i: (i, 0)),
        compiler_params=pltpu.CompilerParams(
            dimension_semantics=("parallel",)),
    )(g, w6, t6, w7, b7)
    return out


# ------------------------- params & pure-JAX reference ------------------------- #

def init_params(key, emb_dims=64, output_channels=40):
    ks = jax.random.split(key, 14)

    def w(k, cout, cin):
        return jax.random.normal(k, (cout, cin), jnp.float32) / np.sqrt(cin)

    def bn(k, c):
        k1, k2, k3, k4 = jax.random.split(k, 4)
        return dict(
            gamma=1.0 + 0.1 * jax.random.normal(k1, (c,), jnp.float32),
            beta=0.1 * jax.random.normal(k2, (c,), jnp.float32),
            mean=0.1 * jax.random.normal(k3, (c,), jnp.float32),
            var=jax.random.uniform(k4, (c,), jnp.float32, 0.5, 1.5))

    return {
        'conv1_w': w(ks[0], 64, 3),            'bn1': bn(ks[1], 64),
        'conv2_w': w(ks[2], 64, 64),           'bn2': bn(ks[3], 64),
        'conv3_w': w(ks[4], 64, 64),           'bn3': bn(ks[5], 64),
        'conv4_w': w(ks[6], 128, 64),          'bn4': bn(ks[7], 128),
        'conv5_w': w(ks[8], emb_dims, 128),    'bn5': bn(ks[9], emb_dims),
        'linear1_w': w(ks[10], 512, emb_dims), 'bn6': bn(ks[11], 512),
        'linear2_w': w(ks[12], output_channels, 512),
        'linear2_b': 0.1 * jax.random.normal(ks[13], (output_channels,), jnp.float32),
    }


def pointnet_ref(params, x):
    """Pure-JAX f32 reference matching the PyTorch eval-mode forward."""
    def bn1d(h, bn):   # h: (B, C, N)
        inv = 1.0 / jnp.sqrt(bn['var'] + _BN_EPS)
        return ((h - bn['mean'][None, :, None]) * inv[None, :, None]
                * bn['gamma'][None, :, None] + bn['beta'][None, :, None])

    def bn1d_vec(h, bn):  # h: (B, C)
        inv = 1.0 / jnp.sqrt(bn['var'] + _BN_EPS)
        return ((h - bn['mean'][None, :]) * inv[None, :]
                * bn['gamma'][None, :] + bn['beta'][None, :])

    h = x.astype(jnp.float32)
    for i in range(1, 6):
        h = jnp.einsum('oc,bcn->bon', params[f'conv{i}_w'], h)
        h = jnp.maximum(bn1d(h, params[f'bn{i}']), 0.0)
    g = jnp.max(h, axis=-1)                    # adaptive_max_pool1d(., 1).squeeze()
    g = g @ params['linear1_w'].T
    g = jnp.maximum(bn1d_vec(g, params['bn6']), 0.0)
    # dropout: identity in eval mode
    return g @ params['linear2_w'].T + params['linear2_b'][None, :]


# ----------------------------------- main ----------------------------------- #

if __name__ == "__main__":
    key = jax.random.PRNGKey(0)
    kp, kx = jax.random.split(key)

    B, N, emb_dims, out_ch = 2, 16, 64, 40
    params = init_params(kp, emb_dims=emb_dims, output_channels=out_ch)
    x = jax.random.normal(kx, (B, 3, N), jnp.float32)

    fwd = jax.jit(functools.partial(pointnet_forward, block_n=2048))
    out = jax.block_until_ready(fwd(params, x))
    assert out.shape == (B, out_ch) and out.dtype == jnp.float32

    ref = jax.block_until_ready(pointnet_ref(params, x))
    # bf16 matmul operands vs. f32 reference -> modest tolerance.
    np.testing.assert_allclose(np.asarray(out), np.asarray(ref),
                               rtol=5e-2, atol=5e-2)
    print("KERNEL_OK")
</pallas_src>

<mosaic_0001>
module attributes {stable_mosaic.version = 11 : i64} {
  func.func @_conv_pool_kernel(%arg0: i32, %arg1: i32, %arg2: memref<1x3x16xbf16, #tpu.memory_space<vmem>>, %arg3: memref<64x3xbf16, #tpu.memory_space<vmem>>, %arg4: memref<64x1xf32, #tpu.memory_space<vmem>>, %arg5: memref<64x64xbf16, #tpu.memory_space<vmem>>, %arg6: memref<64x1xf32, #tpu.memory_space<vmem>>, %arg7: memref<64x64xbf16, #tpu.memory_space<vmem>>, %arg8: memref<64x1xf32, #tpu.memory_space<vmem>>, %arg9: memref<128x64xbf16, #tpu.memory_space<vmem>>, %arg10: memref<128x1xf32, #tpu.memory_space<vmem>>, %arg11: memref<64x128xbf16, #tpu.memory_space<vmem>>, %arg12: memref<64x1xf32, #tpu.memory_space<vmem>>, %arg13: memref<1x64x1xf32, #tpu.memory_space<vmem>>) attributes {dimension_semantics = [#tpu.dimension_semantics<parallel>, #tpu.dimension_semantics<arbitrary>], iteration_bounds = array<i64: 2, 1>, scalar_prefetch = 0 : i64, scratch_operands = 0 : i64, tpu.core_type = #tpu.core_type<tc>, window_params = [{transform_indices = @transform_0, window_bounds = array<i64: 1, 3, 16>}, {pipeline_mode = #tpu.pipeline_mode<synchronous>, transform_indices = @transform_1, window_bounds = array<i64: 64, 3>}, {pipeline_mode = #tpu.pipeline_mode<synchronous>, transform_indices = @transform_2, window_bounds = array<i64: 64, 1>}, {pipeline_mode = #tpu.pipeline_mode<synchronous>, transform_indices = @transform_3, window_bounds = array<i64: 64, 64>}, {pipeline_mode = #tpu.pipeline_mode<synchronous>, transform_indices = @transform_4, window_bounds = array<i64: 64, 1>}, {pipeline_mode = #tpu.pipeline_mode<synchronous>, transform_indices = @transform_5, window_bounds = array<i64: 64, 64>}, {pipeline_mode = #tpu.pipeline_mode<synchronous>, transform_indices = @transform_6, window_bounds = array<i64: 64, 1>}, {pipeline_mode = #tpu.pipeline_mode<synchronous>, transform_indices = @transform_7, window_bounds = array<i64: 128, 64>}, {pipeline_mode = #tpu.pipeline_mode<synchronous>, transform_indices = @transform_8, window_bounds = array<i64: 128, 1>}, {pipeline_mode = #tpu.pipeline_mode<synchronous>, transform_indices = @transform_9, window_bounds = array<i64: 64, 128>}, {pipeline_mode = #tpu.pipeline_mode<synchronous>, transform_indices = @transform_10, window_bounds = array<i64: 64, 1>}, {transform_indices = @transform_11, window_bounds = array<i64: 1, 64, 1>}]} {
    %c0_i32 = arith.constant 0 : i32
    %0 = arith.cmpi eq, %arg1, %c0_i32 : i32
    %1 = arith.extui %0 : i1 to i32
    %c0_i32_0 = arith.constant 0 : i32
    %2 = arith.cmpi ne, %1, %c0_i32_0 : i32
    scf.if %2 {
      %cst_39 = arith.constant 0xFF800000 : f32
      %52 = vector.broadcast %cst_39 : f32 to vector<1x64x1xf32>
      %c0_40 = arith.constant 0 : index
      %c0_41 = arith.constant 0 : index
      %c0_42 = arith.constant 0 : index
      %53 = vector.load %arg13[%c0_40, %c0_41, %c0_42] : memref<1x64x1xf32, #tpu.memory_space<vmem>>, vector<1x64x1xf32>
      tpu.vector_store %arg13[%c0_40, %c0_41, %c0_42], %52 {strides = array<i32>} : memref<1x64x1xf32, #tpu.memory_space<vmem>>, vector<1x64x1xf32>,
    } else {
    }
    %c0 = arith.constant 0 : index
    %c0_1 = arith.constant 0 : index
    %c0_2 = arith.constant 0 : index
    %3 = vector.load %arg2[%c0, %c0_1, %c0_2] : memref<1x3x16xbf16, #tpu.memory_space<vmem>>, vector<1x3x16xbf16>
    %4 = vector.shape_cast %3 : vector<1x3x16xbf16> to vector<3x16xbf16>
    %c0_3 = arith.constant 0 : index
    %c0_4 = arith.constant 0 : index
    %5 = vector.load %arg3[%c0_3, %c0_4] : memref<64x3xbf16, #tpu.memory_space<vmem>>, vector<64x3xbf16>
    %cst = arith.constant dense<0.000000e+00> : vector<64x16xf32>
    %6 = tpu.matmul %5, %4, %cst {dimension_numbers = #tpu.dot_dimension_numbers<[1], [0], [0], [1], [0, 0, 1, 1], [], []>} : vector<64x3xbf16>, vector<3x16xbf16>, vector<64x16xf32> -> vector<64x16xf32>
    %c0_5 = arith.constant 0 : index
    %c0_6 = arith.constant 0 : index
    %7 = vector.load %arg4[%c0_5, %c0_6] : memref<64x1xf32, #tpu.memory_space<vmem>>, vector<64x1xf32>
    %8 = vector.broadcast %7 : vector<64x1xf32> to vector<64x16xf32>
    %9 = arith.addf %6, %8 : vector<64x16xf32>
    %cst_7 = arith.constant 0.000000e+00 : f32
    %10 = vector.broadcast %cst_7 : f32 to vector<64x16xf32>
    %11 = arith.maximumf %9, %10 : vector<64x16xf32>
    %12 = arith.truncf %11 : vector<64x16xf32> to vector<64x16xbf16>
    %c0_8 = arith.constant 0 : index
    %c0_9 = arith.constant 0 : index
    %13 = vector.load %arg5[%c0_8, %c0_9] : memref<64x64xbf16, #tpu.memory_space<vmem>>, vector<64x64xbf16>
    %cst_10 = arith.constant dense<0.000000e+00> : vector<64x16xf32>
    %14 = tpu.matmul %13, %12, %cst_10 {dimension_numbers = #tpu.dot_dimension_numbers<[1], [0], [0], [1], [0, 0, 1, 1], [], []>} : vector<64x64xbf16>, vector<64x16xbf16>, vector<64x16xf32> -> vector<64x16xf32>
    %c0_11 = arith.constant 0 : index
    %c0_12 = arith.constant 0 : index
    %15 = vector.load %arg6[%c0_11, %c0_12] : memref<64x1xf32, #tpu.memory_space<vmem>>, vector<64x1xf32>
    %16 = vector.broadcast %15 : vector<64x1xf32> to vector<64x16xf32>
    %17 = arith.addf %14, %16 : vector<64x16xf32>
    %cst_13 = arith.constant 0.000000e+00 : f32
    %18 = vector.broadcast %cst_13 : f32 to vector<64x16xf32>
    %19 = arith.maximumf %17, %18 : vector<64x16xf32>
    %20 = arith.truncf %19 : vector<64x16xf32> to vector<64x16xbf16>
    %c0_14 = arith.constant 0 : index
    %c0_15 = arith.constant 0 : index
    %21 = vector.load %arg7[%c0_14, %c0_15] : memref<64x64xbf16, #tpu.memory_space<vmem>>, vector<64x64xbf16>
    %cst_16 = arith.constant dense<0.000000e+00> : vector<64x16xf32>
    %22 = tpu.matmul %21, %20, %cst_16 {dimension_numbers = #tpu.dot_dimension_numbers<[1], [0], [0], [1], [0, 0, 1, 1], [], []>} : vector<64x64xbf16>, vector<64x16xbf16>, vector<64x16xf32> -> vector<64x16xf32>
    %c0_17 = arith.constant 0 : index
    %c0_18 = arith.constant 0 : index
    %23 = vector.load %arg8[%c0_17, %c0_18] : memref<64x1xf32, #tpu.memory_space<vmem>>, vector<64x1xf32>
    %24 = vector.broadcast %23 : vector<64x1xf32> to vector<64x16xf32>
    %25 = arith.addf %22, %24 : vector<64x16xf32>
    %cst_19 = arith.constant 0.000000e+00 : f32
    %26 = vector.broadcast %cst_19 : f32 to vector<64x16xf32>
    %27 = arith.maximumf %25, %26 : vector<64x16xf32>
    %28 = arith.truncf %27 : vector<64x16xf32> to vector<64x16xbf16>
    %c0_20 = arith.constant 0 : index
    %c0_21 = arith.constant 0 : index
    %29 = vector.load %arg9[%c0_20, %c0_21] : memref<128x64xbf16, #tpu.memory_space<vmem>>, vector<128x64xbf16>
    %cst_22 = arith.constant dense<0.000000e+00> : vector<128x16xf32>
    %30 = tpu.matmul %29, %28, %cst_22 {dimension_numbers = #tpu.dot_dimension_numbers<[1], [0], [0], [1], [0, 0, 1, 1], [], []>} : vector<128x64xbf16>, vector<64x16xbf16>, vector<128x16xf32> -> vector<128x16xf32>
    %c0_23 = arith.constant 0 : index
    %c0_24 = arith.constant 0 : index
    %31 = vector.load %arg10[%c0_23, %c0_24] : memref<128x1xf32, #tpu.memory_space<vmem>>, vector<128x1xf32>
    %32 = vector.broadcast %31 : vector<128x1xf32> to vector<128x16xf32>
    %33 = arith.addf %30, %32 : vector<128x16xf32>
    %cst_25 = arith.constant 0.000000e+00 : f32
    %34 = vector.broadcast %cst_25 : f32 to vector<128x16xf32>
    %35 = arith.maximumf %33, %34 : vector<128x16xf32>
    %36 = arith.truncf %35 : vector<128x16xf32> to vector<128x16xbf16>
    %c0_26 = arith.constant 0 : index
    %c0_27 = arith.constant 0 : index
    %37 = vector.load %arg11[%c0_26, %c0_27] : memref<64x128xbf16, #tpu.memory_space<vmem>>, vector<64x128xbf16>
    %cst_28 = arith.constant dense<0.000000e+00> : vector<64x16xf32>
    %38 = tpu.matmul %37, %36, %cst_28 {dimension_numbers = #tpu.dot_dimension_numbers<[1], [0], [0], [1], [0, 0, 1, 1], [], []>} : vector<64x128xbf16>, vector<128x16xbf16>, vector<64x16xf32> -> vector<64x16xf32>
    %c0_29 = arith.constant 0 : index
    %c0_30 = arith.constant 0 : index
    %39 = vector.load %arg12[%c0_29, %c0_30] : memref<64x1xf32, #tpu.memory_space<vmem>>, vector<64x1xf32>
    %40 = vector.broadcast %39 : vector<64x1xf32> to vector<64x16xf32>
    %41 = arith.addf %38, %40 : vector<64x16xf32>
    %cst_31 = arith.constant 0.000000e+00 : f32
    %42 = vector.broadcast %cst_31 : f32 to vector<64x16xf32>
    %43 = arith.maximumf %41, %42 : vector<64x16xf32>
    %cst_32 = arith.constant dense<0xFF800000> : vector<64xf32>
    %44 = vector.multi_reduction <maximumf>, %43, %cst_32 [1] : vector<64x16xf32> to vector<64xf32>
    %45 = vector.shape_cast %44 : vector<64xf32> to vector<64x1xf32>
    %c0_33 = arith.constant 0 : index
    %c0_34 = arith.constant 0 : index
    %c0_35 = arith.constant 0 : index
    %46 = vector.load %arg13[%c0_33, %c0_34, %c0_35] : memref<1x64x1xf32, #tpu.memory_space<vmem>>, vector<1x64x1xf32>
    %47 = vector.shape_cast %46 : vector<1x64x1xf32> to vector<64x1xf32>
    %48 = arith.maximumf %47, %45 : vector<64x1xf32>
    %c0_36 = arith.constant 0 : index
    %c0_37 = arith.constant 0 : index
    %c0_38 = arith.constant 0 : index
    %49 = vector.load %arg13[%c0_36, %c0_37, %c0_38] : memref<1x64x1xf32, #tpu.memory_space<vmem>>, vector<1x64x1xf32>
    %50 = vector.shape_cast %49 : vector<1x64x1xf32> to vector<64x1xf32>
    %51 = vector.shape_cast %48 : vector<64x1xf32> to vector<1x64x1xf32>
    tpu.vector_store %arg13[%c0_36, %c0_37, %c0_38], %51 {strides = array<i32>} : memref<1x64x1xf32, #tpu.memory_space<vmem>>, vector<1x64x1xf32>,
    return
  }
  func.func @transform_0(%arg0: i32, %arg1: i32) -> (i32, i32, i32) {
    %c0_i32 = arith.constant 0 : i32
    %c0_i32_0 = arith.constant 0 : i32
    return %arg0, %c0_i32, %arg1 : i32, i32, i32
  }
  func.func @transform_1(%arg0: i32, %arg1: i32) -> (i32, i32) {
    %c0_i32 = arith.constant 0 : i32
    %c0_i32_0 = arith.constant 0 : i32
    %c0_i32_1 = arith.constant 0 : i32
    return %c0_i32, %c0_i32_0 : i32, i32
  }
  func.func @transform_2(%arg0: i32, %arg1: i32) -> (i32, i32) {
    %c0_i32 = arith.constant 0 : i32
    %c0_i32_0 = arith.constant 0 : i32
    %c0_i32_1 = arith.constant 0 : i32
    return %c0_i32, %c0_i32_0 : i32, i32
  }
  func.func @transform_3(%arg0: i32, %arg1: i32) -> (i32, i32) {
    %c0_i32 = arith.constant 0 : i32
    %c0_i32_0 = arith.constant 0 : i32
    %c0_i32_1 = arith.constant 0 : i32
    return %c0_i32, %c0_i32_0 : i32, i32
  }
  func.func @transform_4(%arg0: i32, %arg1: i32) -> (i32, i32) {
    %c0_i32 = arith.constant 0 : i32
    %c0_i32_0 = arith.constant 0 : i32
    %c0_i32_1 = arith.constant 0 : i32
    return %c0_i32, %c0_i32_0 : i32, i32
  }
  func.func @transform_5(%arg0: i32, %arg1: i32) -> (i32, i32) {
    %c0_i32 = arith.constant 0 : i32
    %c0_i32_0 = arith.constant 0 : i32
    %c0_i32_1 = arith.constant 0 : i32
    return %c0_i32, %c0_i32_0 : i32, i32
  }
  func.func @transform_6(%arg0: i32, %arg1: i32) -> (i32, i32) {
    %c0_i32 = arith.constant 0 : i32
    %c0_i32_0 = arith.constant 0 : i32
    %c0_i32_1 = arith.constant 0 : i32
    return %c0_i32, %c0_i32_0 : i32, i32
  }
  func.func @transform_7(%arg0: i32, %arg1: i32) -> (i32, i32) {
    %c0_i32 = arith.constant 0 : i32
    %c0_i32_0 = arith.constant 0 : i32
    %c0_i32_1 = arith.constant 0 : i32
    return %c0_i32, %c0_i32_0 : i32, i32
  }
  func.func @transform_8(%arg0: i32, %arg1: i32) -> (i32, i32) {
    %c0_i32 = arith.constant 0 : i32
    %c0_i32_0 = arith.constant 0 : i32
    %c0_i32_1 = arith.constant 0 : i32
    return %c0_i32, %c0_i32_0 : i32, i32
  }
  func.func @transform_9(%arg0: i32, %arg1: i32) -> (i32, i32) {
    %c0_i32 = arith.constant 0 : i32
    %c0_i32_0 = arith.constant 0 : i32
    %c0_i32_1 = arith.constant 0 : i32
    return %c0_i32, %c0_i32_0 : i32, i32
  }
  func.func @transform_10(%arg0: i32, %arg1: i32) -> (i32, i32) {
    %c0_i32 = arith.constant 0 : i32
    %c0_i32_0 = arith.constant 0 : i32
    %c0_i32_1 = arith.constant 0 : i32
    return %c0_i32, %c0_i32_0 : i32, i32
  }
  func.func @transform_11(%arg0: i32, %arg1: i32) -> (i32, i32, i32) {
    %c0_i32 = arith.constant 0 : i32
    %c0_i32_0 = arith.constant 0 : i32
    %c0_i32_1 = arith.constant 0 : i32
    return %arg0, %c0_i32, %c0_i32_0 : i32, i32, i32
  }
}

module attributes {stable_mosaic.version = 11 : i64} {
  func.func @_head_kernel(%arg0: i32, %arg1: memref<2x64xf32, #tpu.memory_space<vmem>>, %arg2: memref<64x512xf32, #tpu.memory_space<vmem>>, %arg3: memref<1x512xf32, #tpu.memory_space<vmem>>, %arg4: memref<512x40xf32, #tpu.memory_space<vmem>>, %arg5: memref<1x40xf32, #tpu.memory_space<vmem>>, %arg6: memref<2x40xf32, #tpu.memory_space<vmem>>) attributes {dimension_semantics = [#tpu.dimension_semantics<parallel>], iteration_bounds = array<i64: 1>, scalar_prefetch = 0 : i64, scratch_operands = 0 : i64, tpu.core_type = #tpu.core_type<tc>, window_params = [{transform_indices = @transform_0, window_bounds = array<i64: 2, 64>}, {pipeline_mode = #tpu.pipeline_mode<synchronous>, transform_indices = @transform_1, window_bounds = array<i64: 64, 512>}, {pipeline_mode = #tpu.pipeline_mode<synchronous>, transform_indices = @transform_2, window_bounds = array<i64: 1, 512>}, {pipeline_mode = #tpu.pipeline_mode<synchronous>, transform_indices = @transform_3, window_bounds = array<i64: 512, 40>}, {pipeline_mode = #tpu.pipeline_mode<synchronous>, transform_indices = @transform_4, window_bounds = array<i64: 1, 40>}, {transform_indices = @transform_5, window_bounds = array<i64: 2, 40>}]} {
    %c0 = arith.constant 0 : index
    %c0_0 = arith.constant 0 : index
    %0 = vector.load %arg1[%c0, %c0_0] : memref<2x64xf32, #tpu.memory_space<vmem>>, vector<2x64xf32>
    %c0_1 = arith.constant 0 : index
    %c0_2 = arith.constant 0 : index
    %1 = vector.load %arg2[%c0_1, %c0_2] : memref<64x512xf32, #tpu.memory_space<vmem>>, vector<64x512xf32>
    %cst = arith.constant dense<0.000000e+00> : vector<2x512xf32>
    %2 = tpu.matmul %0, %1, %cst {dimension_numbers = #tpu.dot_dimension_numbers<[1], [0], [0], [1], [0, 0, 1, 1], [], []>} : vector<2x64xf32>, vector<64x512xf32>, vector<2x512xf32> -> vector<2x512xf32>
    %c0_3 = arith.constant 0 : index
    %c0_4 = arith.constant 0 : index
    %3 = vector.load %arg3[%c0_3, %c0_4] : memref<1x512xf32, #tpu.memory_space<vmem>>, vector<1x512xf32>
    %4 = vector.broadcast %3 : vector<1x512xf32> to vector<2x512xf32>
    %5 = arith.addf %2, %4 : vector<2x512xf32>
    %cst_5 = arith.constant 0.000000e+00 : f32
    %6 = vector.broadcast %cst_5 : f32 to vector<2x512xf32>
    %7 = arith.maximumf %5, %6 : vector<2x512xf32>
    %c0_6 = arith.constant 0 : index
    %c0_7 = arith.constant 0 : index
    %8 = vector.load %arg4[%c0_6, %c0_7] : memref<512x40xf32, #tpu.memory_space<vmem>>, vector<512x40xf32>
    %cst_8 = arith.constant dense<0.000000e+00> : vector<2x40xf32>
    %9 = tpu.matmul %7, %8, %cst_8 {dimension_numbers = #tpu.dot_dimension_numbers<[1], [0], [0], [1], [0, 0, 1, 1], [], []>} : vector<2x512xf32>, vector<512x40xf32>, vector<2x40xf32> -> vector<2x40xf32>
    %c0_9 = arith.constant 0 : index
    %c0_10 = arith.constant 0 : index
    %10 = vector.load %arg5[%c0_9, %c0_10] : memref<1x40xf32, #tpu.memory_space<vmem>>, vector<1x40xf32>
    %11 = vector.broadcast %10 : vector<1x40xf32> to vector<2x40xf32>
    %12 = arith.addf %9, %11 : vector<2x40xf32>
    %c0_11 = arith.constant 0 : index
    %c0_12 = arith.constant 0 : index
    %13 = vector.load %arg6[%c0_11, %c0_12] : memref<2x40xf32, #tpu.memory_space<vmem>>, vector<2x40xf32>
    tpu.vector_store %arg6[%c0_11, %c0_12], %12 {strides = array<i32>} : memref<2x40xf32, #tpu.memory_space<vmem>>, vector<2x40xf32>,
    return
  }
  func.func @transform_0(%arg0: i32) -> (i32, i32) {
    %c0_i32 = arith.constant 0 : i32
    %c0_i32_0 = arith.constant 0 : i32
    return %arg0, %c0_i32 : i32, i32
  }
  func.func @transform_1(%arg0: i32) -> (i32, i32) {
    %c0_i32 = arith.constant 0 : i32
    %c0_i32_0 = arith.constant 0 : i32
    %c0_i32_1 = arith.constant 0 : i32
    return %c0_i32, %c0_i32_0 : i32, i32
  }
  func.func @transform_2(%arg0: i32) -> (i32, i32) {
    %c0_i32 = arith.constant 0 : i32
    %c0_i32_0 = arith.constant 0 : i32
    %c0_i32_1 = arith.constant 0 : i32
    return %c0_i32, %c0_i32_0 : i32, i32
  }
  func.func @transform_3(%arg0: i32) -> (i32, i32) {
    %c0_i32 = arith.constant 0 : i32
    %c0_i32_0 = arith.constant 0 : i32
    %c0_i32_1 = arith.constant 0 : i32
    return %c0_i32, %c0_i32_0 : i32, i32
  }
  func.func @transform_4(%arg0: i32) -> (i32, i32) {
    %c0_i32 = arith.constant 0 : i32
    %c0_i32_0 = arith.constant 0 : i32
    %c0_i32_1 = arith.constant 0 : i32
    return %c0_i32, %c0_i32_0 : i32, i32
  }
  func.func @transform_5(%arg0: i32) -> (i32, i32) {
    %c0_i32 = arith.constant 0 : i32
    %c0_i32_0 = arith.constant 0 : i32
    return %arg0, %c0_i32 : i32, i32
  }
}

</mosaic_0001>

<llo_original>
// kernel: pointnet_forward.3
$region0: #{pointnet_forward.3}
  #allocation0 [shape = 'u32[]', space=smem, size = 0x4, offset = 0x4, fixed_abs, tag = 'smem constant byte address 0x4 - core index']
  #allocation1 [shape = 'u32[144,128]{1,0:T(1,128)}', space=vmem, size = 0x12000, scoped, tag = 'internal scratch']
  %s0 = inlined_call_operand.vmem [shape: f32[2,64], index: 0, kind: input, shape index: {}]
  %s1 = inlined_call_operand.vmem [shape: f32[64,512], index: 1, kind: input, shape index: {}]
  %s2 = inlined_call_operand.vmem [shape: f32[1,512], index: 2, kind: input, shape index: {}]
  %s3 = inlined_call_operand.vmem [shape: f32[512,40], index: 3, kind: input, shape index: {}]
  %s4 = inlined_call_operand.vmem [shape: f32[1,40], index: 4, kind: input, shape index: {}]
  %s5 = inlined_call_operand.hbm [shape: f32[2,40], index: 5, kind: output, shape index: {}]
  %s6 = sld [smem:[#allocation0]]
  $region30: #{pointnet_forward.3} parent=0
    _
  %s8 = ssub.s32 1, %s6
  %s9 = scalar_select 0, %s8, %s6
  $region1: #{pointnet_forward.3} parent=0
    #allocation2 [shape = 'u8[1024]{0}', space=vmem, size = 0x400, scoped, tag = 'output window, operand 0, single buffered']
    #allocation3 [shape = 's32[1]{0}', space=sflag, size = 0x4, scoped, tag = 'scoped memory for pointnet_forward.3']
    %10 = vsyncpa [#allocation3], 0
    // Predicated region
    $region2: #{pointnet_forward.3} parent=1 // pred_check
      _
    $region3: #{pointnet_forward.3} parent=1 // pred_check_branch
      %12 = sbr.rel (0) target = $region5
    $region4: #{pointnet_forward.3} parent=1 // pred_region
      _
    $region5: #{pointnet_forward.3} parent=1 // pred_fallthru
      _
    // Predicated region
    $region6: #{pointnet_forward.3} parent=1 // pred_check
      _
    $region7: #{pointnet_forward.3} parent=1 // pred_check_branch
      %14 = sbr.rel (0) target = $region9
    $region8: #{pointnet_forward.3} parent=1 // pred_region
      _
    $region9: #{pointnet_forward.3} parent=1 // pred_fallthru
      _
    // Predicated region
    $region10: #{pointnet_forward.3} parent=1 // pred_check
      _
    $region11: #{pointnet_forward.3} parent=1 // pred_check_branch
      %16 = sbr.rel (0) target = $region13
    $region12: #{pointnet_forward.3} parent=1 // pred_region
      _
    $region13: #{pointnet_forward.3} parent=1 // pred_fallthru
      _
    // Predicated region
    $region14: #{pointnet_forward.3} parent=1 // pred_check
      _
    $region15: #{pointnet_forward.3} parent=1 // pred_check_branch
      %18 = sbr.rel (0) target = $region17
    $region16: #{pointnet_forward.3} parent=1 // pred_region
      _
    $region17: #{pointnet_forward.3} parent=1 // pred_fallthru
      _
    // Predicated region
    $region18: #{pointnet_forward.3} parent=1 // pred_check
      _
    $region19: #{pointnet_forward.3} parent=1 // pred_check_branch
      %20 = sbr.rel (0) target = $region21
    $region20: #{pointnet_forward.3} parent=1 // pred_region
      _
    $region21: #{pointnet_forward.3} parent=1 // pred_fallthru
      _
    %v21 = vld [vmem:[%s0] sm:$0x3]
    %v22 = vld [vmem:[%s1] sm:$0xff]
    %v23 = vld [vmem:[%s1 + $0x8] sm:$0xff]
    %v24 = vld [vmem:[%s1 + $0x10] sm:$0xff]
    %v25 = vld [vmem:[%s1 + $0x18] sm:$0xff]
    %v26 = vld [vmem:[%s1 + $0x20] sm:$0xff]
    %v27 = vld [vmem:[%s1 + $0x28] sm:$0xff]
    %v28 = vld [vmem:[%s1 + $0x30] sm:$0xff]
    %v29 = vld [vmem:[%s1 + $0x38] sm:$0xff]
    %v30 = vld [vmem:[%s1 + $0x40] sm:$0xff]
    %v31 = vld [vmem:[%s1 + $0x48] sm:$0xff]
    %v32 = vld [vmem:[%s1 + $0x50] sm:$0xff]
    %v33 = vld [vmem:[%s1 + $0x58] sm:$0xff]
    %v34 = vld [vmem:[%s1 + $0x60] sm:$0xff]
    %v35 = vld [vmem:[%s1 + $0x68] sm:$0xff]
    %v36 = vld [vmem:[%s1 + $0x70] sm:$0xff]
    %v37 = vld [vmem:[%s1 + $0x78] sm:$0xff]
    %v38 = vld [vmem:[%s1 + $0x80] sm:$0xff]
    %v39 = vld [vmem:[%s1 + $0x88] sm:$0xff]
    %v40 = vld [vmem:[%s1 + $0x90] sm:$0xff]
    %v41 = vld [vmem:[%s1 + $0x98] sm:$0xff]
    %v42 = vld [vmem:[%s1 + $0xa0] sm:$0xff]
    %v43 = vld [vmem:[%s1 + $0xa8] sm:$0xff]
    %v44 = vld [vmem:[%s1 + $0xb0] sm:$0xff]
    %v45 = vld [vmem:[%s1 + $0xb8] sm:$0xff]
    %v46 = vld [vmem:[%s1 + $0xc0] sm:$0xff]
    %v47 = vld [vmem:[%s1 + $0xc8] sm:$0xff]
    %v48 = vld [vmem:[%s1 + $0xd0] sm:$0xff]
    %v49 = vld [vmem:[%s1 + $0xd8] sm:$0xff]
    %v50 = vld [vmem:[%s1 + $0xe0] sm:$0xff]
    %v51 = vld [vmem:[%s1 + $0xe8] sm:$0xff]
    %v52 = vld [vmem:[%s1 + $0xf0] sm:$0xff]
    %v53 = vld [vmem:[%s1 + $0xf8] sm:$0xff]
    %v54 = vld [vmem:[%s2] sm:$0xf]
    %v56 = vlaneseq
    %v57 = vshrl.u32 %v56, 7
    %v58 = vsub.s32 0, %v57
    %v59 = vrot.slane %v54, %v58
    %v60 = vlaneseq
    %v61 = vshrl.u32 %v60, 7
    %v62 = vsub.s32 1, %v61
    %v63 = vrot.slane %v54, %v62
    %v64 = vlaneseq
    %v65 = vshrl.u32 %v64, 7
    %v66 = vsub.s32 2, %v65
    %v67 = vrot.slane %v54, %v66
    %v68 = vlaneseq
    %v69 = vshrl.u32 %v68, 7
    %v70 = vsub.s32 3, %v69
    %v71 = vrot.slane %v54, %v70
    %vm76 = vcmask 523264
    %v78 = vsel %vm76, %v21, 0
    %80 = vmatprep.subr.mxu0 %v23
    %81 = vmatpush1.msra.mxu0 %v22
    %82 = vmatprep.subr.mxu0 %v27
    %83 = vmatpush1.msra.mxu0 %v26
    %84 = vmatprep.subr.mxu0 %v31
    %85 = vmatpush1.msra.mxu0 %v30
    %86 = vmatprep.subr.mxu0 %v35
    %87 = vmatpush1.msra.mxu0 %v34
    %88 = vmatprep.subr.mxu0 %v39
    %89 = vmatpush1.msra.mxu0 %v38
    %90 = vmatprep.subr.mxu0 %v43
    %91 = vmatpush1.msra.mxu0 %v42
    %92 = vmatprep.subr.mxu0 %v47
    %93 = vmatpush1.msra.mxu0 %v46
    %94 = vmatprep.subr.mxu0 %v51
    %95 = vmatpush1.msra.mxu0 %v50
    %96 = vmatprep.subr.mxu0 0.0
    %97 = vmatpush1.msra.mxu0 0.0
    %98 = vmatprep.subr.mxu0 0.0
    %99 = vmatpush1.msra.mxu0 0.0
    %100 = vmatprep.subr.mxu0 0.0
    %101 = vmatpush1.msra.mxu0 0.0
    %102 = vmatprep.subr.mxu0 0.0
    %103 = vmatpush1.msra.mxu0 0.0
    %104 = vmatprep.subr.mxu0 0.0
    %105 = vmatpush1.msra.mxu0 0.0
    %106 = vmatprep.subr.mxu0 0.0
    %107 = vmatpush1.msra.mxu0 0.0
    %108 = vmatprep.subr.mxu0 0.0
    %109 = vmatpush1.msra.mxu0 0.0
    %110 = vmatprep.subr.mxu0 0.0
    %111 = vmatpush1.msra.mxu0 0.0
    %112 = vmatprep.subr.mxu0 0.0
    %113 = vmatpush1.msra.mxu0 0.0
    %114 = vmatprep.subr.mxu0 0.0
    %115 = vmatpush1.msra.mxu0 0.0
    %116 = vmatprep.subr.mxu0 0.0
    %117 = vmatpush1.msra.mxu0 0.0
    %118 = vmatprep.subr.mxu0 0.0
    %119 = vmatpush1.msra.mxu0 0.0
    %120 = vmatprep.subr.mxu0 0.0
    %121 = vmatpush1.msra.mxu0 0.0
    %122 = vmatprep.subr.mxu0 0.0
    %123 = vmatpush1.msra.mxu0 0.0
    %124 = vmatprep.subr.mxu0 0.0
    %125 = vmatpush1.msra.mxu0 0.0
    %126 = vmatprep.subr.mxu0 0.0
    %127 = vmatpush1.msra.mxu0 0.0
    %128 = vmatprep.subr.mxu0 0.0
    %129 = vmatpush1.msra.mxu0 0.0
    %130 = vmatprep.subr.mxu0 0.0
    %131 = vmatpush1.msra.mxu0 0.0
    %132 = vmatprep.subr.mxu0 0.0
    %133 = vmatpush1.msra.mxu0 0.0
    %134 = vmatprep.subr.mxu0 0.0
    %135 = vmatpush1.msra.mxu0 0.0
    %136 = vmatprep.subr.mxu0 0.0
    %137 = vmatpush1.msra.mxu0 0.0
    %138 = vmatprep.subr.mxu0 0.0
    %139 = vmatpush1.msra.mxu0 0.0
    %140 = vmatprep.subr.mxu0 0.0
    %141 = vmatpush1.msra.mxu0 0.0
    %142 = vmatprep.subr.mxu0 0.0
    %143 = vmatpush1.msra.mxu0 0.0
    %144 = vmatprep.mubr.f32.mxu0 0.0
    %145 = vmatmul.mubr.f32.gmra.mrb[0].mxu0 %v78
    %v146 = vpop.f32.mrb[0].mxu0
    %v147 = vadd.f32 %v59, %v146
    %v148 = vpop.f32.mrb[0].mxu0
    %v149 = vadd.f32 %v63, %v148
    %150 = vdwg.mxu0
    %151 = vmatprep.subr.mxu0 %v25
    %152 = vmatpush1.msra.mxu0 %v24
    %153 = vmatprep.subr.mxu0 %v29
    %154 = vmatpush1.msra.mxu0 %v28
    %155 = vmatprep.subr.mxu0 %v33
    %156 = vmatpush1.msra.mxu0 %v32
    %157 = vmatprep.subr.mxu0 %v37
    %158 = vmatpush1.msra.mxu0 %v36
    %159 = vmatprep.subr.mxu0 %v41
    %160 = vmatpush1.msra.mxu0 %v40
    %161 = vmatprep.subr.mxu0 %v45
    %162 = vmatpush1.msra.mxu0 %v44
    %163 = vmatprep.subr.mxu0 %v49
    %164 = vmatpush1.msra.mxu0 %v48
    %165 = vmatprep.subr.mxu0 %v53
    %166 = vmatpush1.msra.mxu0 %v52
    %167 = vmatprep.subr.mxu0 0.0
    %168 = vmatpush1.msra.mxu0 0.0
    %169 = vmatprep.subr.mxu0 0.0
    %170 = vmatpush1.msra.mxu0 0.0
    %171 = vmatprep.subr.mxu0 0.0
    %172 = vmatpush1.msra.mxu0 0.0
    %173 = vmatprep.subr.mxu0 0.0
    %174 = vmatpush1.msra.mxu0 0.0
    %175 = vmatprep.subr.mxu0 0.0
    %176 = vmatpush1.msra.mxu0 0.0
    %177 = vmatprep.subr.mxu0 0.0
    %178 = vmatpush1.msra.mxu0 0.0
    %179 = vmatprep.subr.mxu0 0.0
    %180 = vmatpush1.msra.mxu0 0.0
    %181 = vmatprep.subr.mxu0 0.0
    %182 = vmatpush1.msra.mxu0 0.0
    %183 = vmatprep.subr.mxu0 0.0
    %184 = vmatpush1.msra.mxu0 0.0
    %185 = vmatprep.subr.mxu0 0.0
    %186 = vmatpush1.msra.mxu0 0.0
    %187 = vmatprep.subr.mxu0 0.0
    %188 = vmatpush1.msra.mxu0 0.0
    %189 = vmatprep.subr.mxu0 0.0
    %190 = vmatpush1.msra.mxu0 0.0
    %191 = vmatprep.subr.mxu0 0.0
    %192 = vmatpush1.msra.mxu0 0.0
    %193 = vmatprep.subr.mxu0 0.0
    %194 = vmatpush1.msra.mxu0 0.0
    %195 = vmatprep.subr.mxu0 0.0
    %196 = vmatpush1.msra.mxu0 0.0
    %197 = vmatprep.subr.mxu0 0.0
    %198 = vmatpush1.msra.mxu0 0.0
    %199 = vmatprep.subr.mxu0 0.0
    %200 = vmatpush1.msra.mxu0 0.0
    %201 = vmatprep.subr.mxu0 0.0
    %202 = vmatpush1.msra.mxu0 0.0
    %203 = vmatprep.subr.mxu0 0.0
    %204 = vmatpush1.msra.mxu0 0.0
    %205 = vmatprep.subr.mxu0 0.0
    %206 = vmatpush1.msra.mxu0 0.0
    %207 = vmatprep.subr.mxu0 0.0
    %208 = vmatpush1.msra.mxu0 0.0
    %209 = vmatprep.subr.mxu0 0.0
    %210 = vmatpush1.msra.mxu0 0.0
    %211 = vmatprep.subr.mxu0 0.0
    %212 = vmatpush1.msra.mxu0 0.0
    %213 = vmatprep.subr.mxu0 0.0
    %214 = vmatpush1.msra.mxu0 0.0
    %215 = vmatprep.mubr.f32.mxu0 0.0
    %216 = vmatmul.mubr.f32.gmra.mrb[0].mxu0 %v78
    %v217 = vpop.f32.mrb[0].mxu0
    %v218 = vadd.f32 %v67, %v217
    %v219 = vpop.f32.mrb[0].mxu0
    %v220 = vadd.f32 %v71, %v219
    %221 = vdwg.mxu0
    %v222 = vmax.f32 %v147, 0.0
    %v223 = vmax.f32 %v149, 0.0
    %v224 = vmax.f32 %v218, 0.0
    %v225 = vmax.f32 %v220, 0.0
    %v226 = vld [vmem:[%s3] sm:$0xff]
    %v227 = vld [vmem:[%s3 + $0x8] sm:$0xff]
    %v228 = vld [vmem:[%s3 + $0x10] sm:$0xff]
    %v229 = vld [vmem:[%s3 + $0x18] sm:$0xff]
    %v230 = vld [vmem:[%s3 + $0x20] sm:$0xff]
    %v231 = vld [vmem:[%s3 + $0x28] sm:$0xff]
    %v232 = vld [vmem:[%s3 + $0x30] sm:$0xff]
    %v233 = vld [vmem:[%s3 + $0x38] sm:$0xff]
    %v234 = vld [vmem:[%s3 + $0x40] sm:$0xff]
    %v235 = vld [vmem:[%s3 + $0x48] sm:$0xff]
    %v236 = vld [vmem:[%s3 + $0x50] sm:$0xff]
    %v237 = vld [vmem:[%s3 + $0x58] sm:$0xff]
    %v238 = vld [vmem:[%s3 + $0x60] sm:$0xff]
    %v239 = vld [vmem:[%s3 + $0x68] sm:$0xff]
    %v240 = vld [vmem:[%s3 + $0x70] sm:$0xff]
    %v241 = vld [vmem:[%s3 + $0x78] sm:$0xff]
    %v242 = vld [vmem:[%s3 + $0x80] sm:$0xff]
    %v243 = vld [vmem:[%s3 + $0x88] sm:$0xff]
    %v244 = vld [vmem:[%s3 + $0x90] sm:$0xff]
    %v245 = vld [vmem:[%s3 + $0x98] sm:$0xff]
    %v246 = vld [vmem:[%s3 + $0xa0] sm:$0xff]
    %v247 = vld [vmem:[%s3 + $0xa8] sm:$0xff]
    %v248 = vld [vmem:[%s3 + $0xb0] sm:$0xff]
    %v249 = vld [vmem:[%s3 + $0xb8] sm:$0xff]
    %v250 = vld [vmem:[%s3 + $0xc0] sm:$0xff]
    %v251 = vld [vmem:[%s3 + $0xc8] sm:$0xff]
    %v252 = vld [vmem:[%s3 + $0xd0] sm:$0xff]
    %v253 = vld [vmem:[%s3 + $0xd8] sm:$0xff]
    %v254 = vld [vmem:[%s3 + $0xe0] sm:$0xff]
    %v255 = vld [vmem:[%s3 + $0xe8] sm:$0xff]
    %v256 = vld [vmem:[%s3 + $0xf0] sm:$0xff]
    %v257 = vld [vmem:[%s3 + $0xf8] sm:$0xff]
    %v258 = vld [vmem:[%s3 + $0x100] sm:$0xff]
    %v259 = vld [vmem:[%s3 + $0x108] sm:$0xff]
    %v260 = vld [vmem:[%s3 + $0x110] sm:$0xff]
    %v261 = vld [vmem:[%s3 + $0x118] sm:$0xff]
    %v262 = vld [vmem:[%s3 + $0x120] sm:$0xff]
    %v263 = vld [vmem:[%s3 + $0x128] sm:$0xff]
    %v264 = vld [vmem:[%s3 + $0x130] sm:$0xff]
    %v265 = vld [vmem:[%s3 + $0x138] sm:$0xff]
    %v266 = vld [vmem:[%s3 + $0x140] sm:$0xff]
    %v267 = vld [vmem:[%s3 + $0x148] sm:$0xff]
    %v268 = vld [vmem:[%s3 + $0x150] sm:$0xff]
    %v269 = vld [vmem:[%s3 + $0x158] sm:$0xff]
    %v270 = vld [vmem:[%s3 + $0x160] sm:$0xff]
    %v271 = vld [vmem:[%s3 + $0x168] sm:$0xff]
    %v272 = vld [vmem:[%s3 + $0x170] sm:$0xff]
    %v273 = vld [vmem:[%s3 + $0x178] sm:$0xff]
    %v274 = vld [vmem:[%s3 + $0x180] sm:$0xff]
    %v275 = vld [vmem:[%s3 + $0x188] sm:$0xff]
    %v276 = vld [vmem:[%s3 + $0x190] sm:$0xff]
    %v277 = vld [vmem:[%s3 + $0x198] sm:$0xff]
    %v278 = vld [vmem:[%s3 + $0x1a0] sm:$0xff]
    %v279 = vld [vmem:[%s3 + $0x1a8] sm:$0xff]
    %v280 = vld [vmem:[%s3 + $0x1b0] sm:$0xff]
    %v281 = vld [vmem:[%s3 + $0x1b8] sm:$0xff]
    %v282 = vld [vmem:[%s3 + $0x1c0] sm:$0xff]
    %v283 = vld [vmem:[%s3 + $0x1c8] sm:$0xff]
    %v284 = vld [vmem:[%s3 + $0x1d0] sm:$0xff]
    %v285 = vld [vmem:[%s3 + $0x1d8] sm:$0xff]
    %v286 = vld [vmem:[%s3 + $0x1e0] sm:$0xff]
    %v287 = vld [vmem:[%s3 + $0x1e8] sm:$0xff]
    %v288 = vld [vmem:[%s3 + $0x1f0] sm:$0xff]
    %v289 = vld [vmem:[%s3 + $0x1f8] sm:$0xff]
    %v290 = vld [vmem:[%s4] sm:$0x1]
    %v292 = vlaneseq
    %v293 = vshrl.u32 %v292, 7
    %v294 = vsub.s32 0, %v293
    %v295 = vrot.slane %v290, %v294
    %297 = vmatprep.subr.mxu0 0.0
    %298 = vmatpush1.msra.mxu0 %v226
    %299 = vmatprep.subr.mxu0 0.0
    %300 = vmatpush1.msra.mxu0 %v227
    %301 = vmatprep.subr.mxu0 0.0
    %302 = vmatpush1.msra.mxu0 %v228
    %303 = vmatprep.subr.mxu0 0.0
    %304 = vmatpush1.msra.mxu0 %v229
    %305 = vmatprep.subr.mxu0 0.0
    %306 = vmatpush1.msra.mxu0 %v230
    %307 = vmatprep.subr.mxu0 0.0
    %308 = vmatpush1.msra.mxu0 %v231
    %309 = vmatprep.subr.mxu0 0.0
    %310 = vmatpush1.msra.mxu0 %v232
    %311 = vmatprep.subr.mxu0 0.0
    %312 = vmatpush1.msra.mxu0 %v233
    %313 = vmatprep.subr.mxu0 0.0
    %314 = vmatpush1.msra.mxu0 %v234
    %315 = vmatprep.subr.mxu0 0.0
    %316 = vmatpush1.msra.mxu0 %v235
    %317 = vmatprep.subr.mxu0 0.0
    %318 = vmatpush1.msra.mxu0 %v236
    %319 = vmatprep.subr.mxu0 0.0
    %320 = vmatpush1.msra.mxu0 %v237
    %321 = vmatprep.subr.mxu0 0.0
    %322 = vmatpush1.msra.mxu0 %v238
    %323 = vmatprep.subr.mxu0 0.0
    %324 = vmatpush1.msra.mxu0 %v239
    %325 = vmatprep.subr.mxu0 0.0
    %326 = vmatpush1.msra.mxu0 %v240
    %327 = vmatprep.subr.mxu0 0.0
    %328 = vmatpush1.msra.mxu0 %v241
    %329 = vmatprep.subr.mxu0 0.0
    %330 = vmatpush1.msra.mxu0 %v242
    %331 = vmatprep.subr.mxu0 0.0
    %332 = vmatpush1.msra.mxu0 %v243
    %333 = vmatprep.subr.mxu0 0.0
    %334 = vmatpush1.msra.mxu0 %v244
    %335 = vmatprep.subr.mxu0 0.0
    %336 = vmatpush1.msra.mxu0 %v245
    %337 = vmatprep.subr.mxu0 0.0
    %338 = vmatpush1.msra.mxu0 %v246
    %339 = vmatprep.subr.mxu0 0.0
    %340 = vmatpush1.msra.mxu0 %v247
    %341 = vmatprep.subr.mxu0 0.0
    %342 = vmatpush1.msra.mxu0 %v248
    %343 = vmatprep.subr.mxu0 0.0
    %344 = vmatpush1.msra.mxu0 %v249
    %345 = vmatprep.subr.mxu0 0.0
    %346 = vmatpush1.msra.mxu0 %v250
    %347 = vmatprep.subr.mxu0 0.0
    %348 = vmatpush1.msra.mxu0 %v251
    %349 = vmatprep.subr.mxu0 0.0
    %350 = vmatpush1.msra.mxu0 %v252
    %351 = vmatprep.subr.mxu0 0.0
    %352 = vmatpush1.msra.mxu0 %v253
    %353 = vmatprep.subr.mxu0 0.0
    %354 = vmatpush1.msra.mxu0 %v254
    %355 = vmatprep.subr.mxu0 0.0
    %356 = vmatpush1.msra.mxu0 %v255
    %357 = vmatprep.subr.mxu0 0.0
    %358 = vmatpush1.msra.mxu0 %v256
    %359 = vmatprep.subr.mxu0 0.0
    %360 = vmatpush1.msra.mxu0 %v257
    %361 = vmatprep.mubr.f32.mxu0 %v223
    %362 = vmatmul.mubr.f32.gmra.mrb[0].mxu0 %v222
    %v363 = vpop.f32.mrb[0].mxu0
    %v364 = vadd.f32 %v295, %v363
    %v365 = vpop.f32.mrb[0].mxu0
    %366 = vdwg.mxu0
    %367 = vmatprep.subr.mxu0 0.0
    %368 = vmatpush1.msra.mxu0 %v258
    %369 = vmatprep.subr.mxu0 0.0
    %370 = vmatpush1.msra.mxu0 %v259
    %371 = vmatprep.subr.mxu0 0.0
    %372 = vmatpush1.msra.mxu0 %v260
    %373 = vmatprep.subr.mxu0 0.0
    %374 = vmatpush1.msra.mxu0 %v261
    %375 = vmatprep.subr.mxu0 0.0
    %376 = vmatpush1.msra.mxu0 %v262
    %377 = vmatprep.subr.mxu0 0.0
    %378 = vmatpush1.msra.mxu0 %v263
    %379 = vmatprep.subr.mxu0 0.0
    %380 = vmatpush1.msra.mxu0 %v264
    %381 = vmatprep.subr.mxu0 0.0
    %382 = vmatpush1.msra.mxu0 %v265
    %383 = vmatprep.subr.mxu0 0.0
    %384 = vmatpush1.msra.mxu0 %v266
    %385 = vmatprep.subr.mxu0 0.0
    %386 = vmatpush1.msra.mxu0 %v267
    %387 = vmatprep.subr.mxu0 0.0
    %388 = vmatpush1.msra.mxu0 %v268
    %389 = vmatprep.subr.mxu0 0.0
    %390 = vmatpush1.msra.mxu0 %v269
    %391 = vmatprep.subr.mxu0 0.0
    %392 = vmatpush1.msra.mxu0 %v270
    %393 = vmatprep.subr.mxu0 0.0
    %394 = vmatpush1.msra.mxu0 %v271
    %395 = vmatprep.subr.mxu0 0.0
    %396 = vmatpush1.msra.mxu0 %v272
    %397 = vmatprep.subr.mxu0 0.0
    %398 = vmatpush1.msra.mxu0 %v273
    %399 = vmatprep.subr.mxu0 0.0
    %400 = vmatpush1.msra.mxu0 %v274
    %401 = vmatprep.subr.mxu0 0.0
    %402 = vmatpush1.msra.mxu0 %v275
    %403 = vmatprep.subr.mxu0 0.0
    %404 = vmatpush1.msra.mxu0 %v276
    %405 = vmatprep.subr.mxu0 0.0
    %406 = vmatpush1.msra.mxu0 %v277
    %407 = vmatprep.subr.mxu0 0.0
    %408 = vmatpush1.msra.mxu0 %v278
    %409 = vmatprep.subr.mxu0 0.0
    %410 = vmatpush1.msra.mxu0 %v279
    %411 = vmatprep.subr.mxu0 0.0
    %412 = vmatpush1.msra.mxu0 %v280
    %413 = vmatprep.subr.mxu0 0.0
    %414 = vmatpush1.msra.mxu0 %v281
    %415 = vmatprep.subr.mxu0 0.0
    %416 = vmatpush1.msra.mxu0 %v282
    %417 = vmatprep.subr.mxu0 0.0
    %418 = vmatpush1.msra.mxu0 %v283
    %419 = vmatprep.subr.mxu0 0.0
    %420 = vmatpush1.msra.mxu0 %v284
    %421 = vmatprep.subr.mxu0 0.0
    %422 = vmatpush1.msra.mxu0 %v285
    %423 = vmatprep.subr.mxu0 0.0
    %424 = vmatpush1.msra.mxu0 %v286
    %425 = vmatprep.subr.mxu0 0.0
    %426 = vmatpush1.msra.mxu0 %v287
    %427 = vmatprep.subr.mxu0 0.0
    %428 = vmatpush1.msra.mxu0 %v288
    %429 = vmatprep.subr.mxu0 0.0
    %430 = vmatpush1.msra.mxu0 %v289
    %431 = vmatprep.mubr.f32.mxu0 %v225
    %432 = vmatmul.mubr.f32.gmra.mrb[0].mxu0 %v224
    %v433 = vpop.f32.mrb[0].mxu0
    %v434 = vadd.f32 %v364, %v433
    %v435 = vpop.f32.mrb[0].mxu0
    %436 = vdwg.mxu0
    %vm437 = vcmask 320512
    %438 = vst.msk [vmem:[#allocation2] sm:$0x3] %vm437, %v434
    // Predicated region
    $region22: #{pointnet_forward.3} parent=1 // pred_check
      _
    $region23: #{pointnet_forward.3} parent=1 // pred_check_branch
      %440 = sbr.rel (0) target = $region25
    $region24: #{pointnet_forward.3} parent=1 // pred_region
      %s442 = ssub.s32 32, 32
      %443 = vsyncadd [#allocation3], %s442
      %s445 = sshll.u32 [#allocation2], 4
      %s446 = int_to_ptr.vmem [resolvable:$true] %s445
      %448 = dma.vmem_to_hbm [thread:$0]  %s446, 32, %s5, [#allocation3]
    $region25: #{pointnet_forward.3} parent=1 // pred_fallthru
      _
    // Predicated region
    $region26: #{pointnet_forward.3} parent=1 // pred_check
      _
    $region27: #{pointnet_forward.3} parent=1 // pred_check_branch
      %450 = sbr.rel (0) target = $region29
    $region28: #{pointnet_forward.3} parent=1 // pred_region
      %451 = dma.done [#allocation3], 32
    $region29: #{pointnet_forward.3} parent=1 // pred_fallthru
      _
    %452 = vsyncpa [#allocation3], 1

// kernel: pointnet_forward.2
$region0: #{pointnet_forward.2}
  #allocation0 [shape = 'u32[]', space=smem, size = 0x4, offset = 0x4, fixed_abs, tag = 'smem constant byte address 0x4 - core index']
  #allocation1 [shape = 'u32[144,128]{1,0:T(1,128)}', space=vmem, size = 0x12000, scoped, tag = 'internal scratch']
  %s0 = inlined_call_operand.vmem [shape: bf16[2,3,16], index: 0, kind: input, shape index: {}]
  %s1 = inlined_call_operand.vmem [shape: bf16[64,3], index: 1, kind: input, shape index: {}]
  %s2 = inlined_call_operand.vmem [shape: f32[64,1], index: 2, kind: input, shape index: {}]
  %s3 = inlined_call_operand.vmem [shape: bf16[64,64], index: 3, kind: input, shape index: {}]
  %s4 = inlined_call_operand.vmem [shape: f32[64,1], index: 4, kind: input, shape index: {}]
  %s5 = inlined_call_operand.vmem [shape: bf16[64,64], index: 5, kind: input, shape index: {}]
  %s6 = inlined_call_operand.vmem [shape: f32[64,1], index: 6, kind: input, shape index: {}]
  %s7 = inlined_call_operand.vmem [shape: bf16[128,64], index: 7, kind: input, shape index: {}]
  %s8 = inlined_call_operand.vmem [shape: f32[128,1], index: 8, kind: input, shape index: {}]
  %s9 = inlined_call_operand.vmem [shape: bf16[64,128], index: 9, kind: input, shape index: {}]
  %s10 = inlined_call_operand.vmem [shape: f32[64,1], index: 10, kind: input, shape index: {}]
  %s11 = inlined_call_operand.vmem [shape: f32[2,64,1], index: 11, kind: output, shape index: {}]
  %s12 = sld [smem:[#allocation0]]
  $region81: #{pointnet_forward.2} parent=0
    _
  %s14 = ssub.s32 1, %s12
  %s15 = scalar_select 0, %s14, %s12
  loop: start=0, step=1, limit=4
  $region2: #{pointnet_forward.2} parent=0 // loop_pre_header
    _
  $region3: #{pointnet_forward.2} parent=0 // loop_header
    %s17 = sphi 0, %s21
    %p18 = scmp.ge.s32.totalorder %s17, 4
    %s24 = sphi 0, %s36
    %s25 = sphi 0, %s32
    %s26 = sphi 0, %s24
    %s27 = sphi 0, %s25
    %s28 = sphi 0, %s26
    %s29 = sphi 0, %s27
    %s41 = sphi 0, %s43
    %s44 = sphi 0, %s41
    %s45 = sphi 0, %s44
    %s61 = sphi 0, %s45
    %s65 = sphi 0, %s65
    %s67 = sphi 0, %s65
    %s68 = sphi 0, %s67
    %s82 = sphi 0, %s68
    %s86 = sphi 0, %s86
    %s88 = sphi 0, %s86
    %s89 = sphi 0, %s88
    %s103 = sphi 0, %s89
    %s107 = sphi 0, %s107
    %s109 = sphi 0, %s107
    %s110 = sphi 0, %s109
    %s124 = sphi 0, %s110
    %s128 = sphi 0, %s128
    %s130 = sphi 0, %s128
    %s131 = sphi 0, %s130
    %s145 = sphi 0, %s131
    %s149 = sphi 0, %s149
    %s151 = sphi 0, %s149
    %s152 = sphi 0, %s151
    %s166 = sphi 0, %s152
    %s170 = sphi 0, %s170
    %s172 = sphi 0, %s170
    %s173 = sphi 0, %s172
    %s187 = sphi 0, %s173
    %s191 = sphi 0, %s191
    %s193 = sphi 0, %s191
    %s194 = sphi 0, %s193
    %s208 = sphi 0, %s194
    %s212 = sphi 0, %s212
    %s214 = sphi 0, %s212
    %s215 = sphi 0, %s214
    %s229 = sphi 0, %s215
    %s233 = sphi 0, %s233
    %s235 = sphi 0, %s233
    %s236 = sphi 0, %s235
    %s250 = sphi 0, %s236
    %s254 = sphi 0, %s254
    %s256 = sphi 0, %s254
    %s257 = sphi 0, %s256
    %s271 = sphi 0, %s257
    %s277 = sphi 0, %s279
    %s280 = sphi 0, %s277
    %s281 = sphi 0, %s280
    %s297 = sphi 0, %s281
  $region4: #{pointnet_forward.2} parent=0 // loop_header_branch
    %20 = sbr.rel (%p18) target = $region8
  $region5: #{pointnet_forward.2} parent=0 // loop_body
    %s22 = ssub.s32 %s17, 1
    %s23 = ssub.s32 %s17, 2
    %s30 = sadd.s32 1, %s25
    %p31 = scmp.ge.s32.totalorder %s30, 1
    %s32 = scalar_select %p31, 0, %s30
    %s33 = sadd.s32 1, %s24
    %s34 = scalar_select %p31, %s33, %s24
    %p35 = scmp.ge.s32.totalorder %s34, 2
    %s36 = scalar_select %p35, 0, %s34
    %s37 = ssub.s32 %s24, %s36
    %s38 = ssub.s32 %s25, %s32
    %s39 = sor.u32 %s37, %s38
    %p40 = scmp.eq.s32.totalorder %s39, 0
    %s42 = sadd.s32 %s41, 1
    %s43 = scalar_select %p40, %s41, %s42
    %p46 = pneg %p40
    %p47 = scmp.eq.s32.totalorder %s17, 1
    %p48 = por %p46, %p47
    %p49 = scmp.ne.s32.totalorder %s41, %s44
    %p50 = scmp.eq.s32.totalorder %s17, 0
    %p51 = por %p49, %p50
    %p52 = scmp.ne.s32.totalorder %s41, %s44
    %p53 = scmp.eq.s32.totalorder %s22, 1
    %p54 = por %p52, %p53
    %p55 = scmp.ne.s32.totalorder %s44, %s45
    %p56 = scmp.eq.s32.totalorder %s22, 0
    %p57 = por %p55, %p56
    %p58 = scmp.ne.s32.totalorder %s44, %s45
    %p59 = scmp.eq.s32.totalorder %s23, 1
    %p60 = por %p58, %p59
    %p62 = scmp.ne.s32.totalorder %s45, %s61
    %p63 = scmp.eq.s32.totalorder %s23, 0
    %p64 = por %p62, %p63
    %s66 = sadd.s32 %s65, 1
    %p69 = scmp.eq.s32.totalorder %s17, 1
    %p70 = scmp.ne.s32.totalorder %s65, %s67
    %p71 = scmp.eq.s32.totalorder %s17, 0
    %p72 = por %p70, %p71
    %p73 = scmp.ne.s32.totalorder %s65, %s67
    %p74 = scmp.eq.s32.totalorder %s22, 1
    %p75 = por %p73, %p74
    %p76 = scmp.ne.s32.totalorder %s67, %s68
    %p77 = scmp.eq.s32.totalorder %s22, 0
    %p78 = por %p76, %p77
    %p79 = scmp.ne.s32.totalorder %s67, %s68
    %p80 = scmp.eq.s32.totalorder %s23, 1
    %p81 = por %p79, %p80
    %p83 = scmp.ne.s32.totalorder %s68, %s82
    %p84 = scmp.eq.s32.totalorder %s23, 0
    %p85 = por %p83, %p84
    %s87 = sadd.s32 %s86, 1
    %p90 = scmp.eq.s32.totalorder %s17, 1
    %p91 = scmp.ne.s32.totalorder %s86, %s88
    %p92 = scmp.eq.s32.totalorder %s17, 0
    %p93 = por %p91, %p92
    %p94 = scmp.ne.s32.totalorder %s86, %s88
    %p95 = scmp.eq.s32.totalorder %s22, 1
    %p96 = por %p94, %p95
    %p97 = scmp.ne.s32.totalorder %s88, %s89
    %p98 = scmp.eq.s32.totalorder %s22, 0
    %p99 = por %p97, %p98
    %p100 = scmp.ne.s32.totalorder %s88, %s89
    %p101 = scmp.eq.s32.totalorder %s23, 1
    %p102 = por %p100, %p101
    %p104 = scmp.ne.s32.totalorder %s89, %s103
    %p105 = scmp.eq.s32.totalorder %s23, 0
    %p106 = por %p104, %p105
    %s108 = sadd.s32 %s107, 1
    %p111 = scmp.eq.s32.totalorder %s17, 1
    %p112 = scmp.ne.s32.totalorder %s107, %s109
    %p113 = scmp.eq.s32.totalorder %s17, 0
    %p114 = por %p112, %p113
    %p115 = scmp.ne.s32.totalorder %s107, %s109
    %p116 = scmp.eq.s32.totalorder %s22, 1
    %p117 = por %p115, %p116
    %p118 = scmp.ne.s32.totalorder %s109, %s110
    %p119 = scmp.eq.s32.totalorder %s22, 0
    %p120 = por %p118, %p119
    %p121 = scmp.ne.s32.totalorder %s109, %s110
    %p122 = scmp.eq.s32.totalorder %s23, 1
    %p123 = por %p121, %p122
    %p125 = scmp.ne.s32.totalorder %s110, %s124
    %p126 = scmp.eq.s32.totalorder %s23, 0
    %p127 = por %p125, %p126
    %s129 = sadd.s32 %s128, 1
    %p132 = scmp.eq.s32.totalorder %s17, 1
    %p133 = scmp.ne.s32.totalorder %s128, %s130
    %p134 = scmp.eq.s32.totalorder %s17, 0
    %p135 = por %p133, %p134
    %p136 = scmp.ne.s32.totalorder %s128, %s130
    %p137 = scmp.eq.s32.totalorder %s22, 1
    %p138 = por %p136, %p137
    %p139 = scmp.ne.s32.totalorder %s130, %s131
    %p140 = scmp.eq.s32.totalorder %s22, 0
    %p141 = por %p139, %p140
    %p142 = scmp.ne.s32.totalorder %s130, %s131
    %p143 = scmp.eq.s32.totalorder %s23, 1
    %p144 = por %p142, %p143
    %p146 = scmp.ne.s32.totalorder %s131, %s145
    %p147 = scmp.eq.s32.totalorder %s23, 0
    %p148 = por %p146, %p147
    %s150 = sadd.s32 %s149, 1
    %p153 = scmp.eq.s32.totalorder %s17, 1
    %p154 = scmp.ne.s32.totalorder %s149, %s151
    %p155 = scmp.eq.s32.totalorder %s17, 0
    %p156 = por %p154, %p155
    %p157 = scmp.ne.s32.totalorder %s149, %s151
    %p158 = scmp.eq.s32.totalorder %s22, 1
    %p159 = por %p157, %p158
    %p160 = scmp.ne.s32.totalorder %s151, %s152
    %p161 = scmp.eq.s32.totalorder %s22, 0
    %p162 = por %p160, %p161
    %p163 = scmp.ne.s32.totalorder %s151, %s152
    %p164 = scmp.eq.s32.totalorder %s23, 1
    %p165 = por %p163, %p164
    %p167 = scmp.ne.s32.totalorder %s152, %s166
    %p168 = scmp.eq.s32.totalorder %s23, 0
    %p169 = por %p167, %p168
    %s171 = sadd.s32 %s170, 1
    %p174 = scmp.eq.s32.totalorder %s17, 1
    %p175 = scmp.ne.s32.totalorder %s170, %s172
    %p176 = scmp.eq.s32.totalorder %s17, 0
    %p177 = por %p175, %p176
    %p178 = scmp.ne.s32.totalorder %s170, %s172
    %p179 = scmp.eq.s32.totalorder %s22, 1
    %p180 = por %p178, %p179
    %p181 = scmp.ne.s32.totalorder %s172, %s173
    %p182 = scmp.eq.s32.totalorder %s22, 0
    %p183 = por %p181, %p182
    %p184 = scmp.ne.s32.totalorder %s172, %s173
    %p185 = scmp.eq.s32.totalorder %s23, 1
    %p186 = por %p184, %p185
    %p188 = scmp.ne.s32.totalorder %s173, %s187
    %p189 = scmp.eq.s32.totalorder %s23, 0
    %p190 = por %p188, %p189
    %s192 = sadd.s32 %s191, 1
    %p195 = scmp.eq.s32.totalorder %s17, 1
    %p196 = scmp.ne.s32.totalorder %s191, %s193
    %p197 = scmp.eq.s32.totalorder %s17, 0
    %p198 = por %p196, %p197
    %p199 = scmp.ne.s32.totalorder %s191, %s193
    %p200 = scmp.eq.s32.totalorder %s22, 1
    %p201 = por %p199, %p200
    %p202 = scmp.ne.s32.totalorder %s193, %s194
    %p203 = scmp.eq.s32.totalorder %s22, 0
    %p204 = por %p202, %p203
    %p205 = scmp.ne.s32.totalorder %s193, %s194
    %p206 = scmp.eq.s32.totalorder %s23, 1
    %p207 = por %p205, %p206
    %p209 = scmp.ne.s32.totalorder %s194, %s208
    %p210 = scmp.eq.s32.totalorder %s23, 0
    %p211 = por %p209, %p210
    %s213 = sadd.s32 %s212, 1
    %p216 = scmp.eq.s32.totalorder %s17, 1
    %p217 = scmp.ne.s32.totalorder %s212, %s214
    %p218 = scmp.eq.s32.totalorder %s17, 0
    %p219 = por %p217, %p218
    %p220 = scmp.ne.s32.totalorder %s212, %s214
    %p221 = scmp.eq.s32.totalorder %s22, 1
    %p222 = por %p220, %p221
    %p223 = scmp.ne.s32.totalorder %s214, %s215
    %p224 = scmp.eq.s32.totalorder %s22, 0
    %p225 = por %p223, %p224
    %p226 = scmp.ne.s32.totalorder %s214, %s215
    %p227 = scmp.eq.s32.totalorder %s23, 1
    %p228 = por %p226, %p227
    %p230 = scmp.ne.s32.totalorder %s215, %s229
    %p231 = scmp.eq.s32.totalorder %s23, 0
    %p232 = por %p230, %p231
    %s234 = sadd.s32 %s233, 1
    %p237 = scmp.eq.s32.totalorder %s17, 1
    %p238 = scmp.ne.s32.totalorder %s233, %s235
    %p239 = scmp.eq.s32.totalorder %s17, 0
    %p240 = por %p238, %p239
    %p241 = scmp.ne.s32.totalorder %s233, %s235
    %p242 = scmp.eq.s32.totalorder %s22, 1
    %p243 = por %p241, %p242
    %p244 = scmp.ne.s32.totalorder %s235, %s236
    %p245 = scmp.eq.s32.totalorder %s22, 0
    %p246 = por %p244, %p245
    %p247 = scmp.ne.s32.totalorder %s235, %s236
    %p248 = scmp.eq.s32.totalorder %s23, 1
    %p249 = por %p247, %p248
    %p251 = scmp.ne.s32.totalorder %s236, %s250
    %p252 = scmp.eq.s32.totalorder %s23, 0
    %p253 = por %p251, %p252
    %s255 = sadd.s32 %s254, 1
    %p258 = scmp.eq.s32.totalorder %s17, 1
    %p259 = scmp.ne.s32.totalorder %s254, %s256
    %p260 = scmp.eq.s32.totalorder %s17, 0
    %p261 = por %p259, %p260
    %p262 = scmp.ne.s32.totalorder %s254, %s256
    %p263 = scmp.eq.s32.totalorder %s22, 1
    %p264 = por %p262, %p263
    %p265 = scmp.ne.s32.totalorder %s256, %s257
    %p266 = scmp.eq.s32.totalorder %s22, 0
    %p267 = por %p265, %p266
    %p268 = scmp.ne.s32.totalorder %s256, %s257
    %p269 = scmp.eq.s32.totalorder %s23, 1
    %p270 = por %p268, %p269
    %p272 = scmp.ne.s32.totalorder %s257, %s271
    %p273 = scmp.eq.s32.totalorder %s23, 0
    %p274 = por %p272, %p273
    %s275 = ssub.s32 %s24, %s36
    %p276 = scmp.eq.s32.totalorder %s275, 0
    %s278 = sadd.s32 %s277, 1
    %s279 = scalar_select %p276, %s277, %s278
    %p282 = pneg %p276
    %p283 = scmp.eq.s32.totalorder %s17, 1
    %p284 = por %p282, %p283
    %p285 = scmp.ne.s32.totalorder %s277, %s280
    %p286 = scmp.eq.s32.totalorder %s17, 0
    %p287 = por %p285, %p286
    %p288 = scmp.ne.s32.totalorder %s277, %s280
    %p289 = scmp.eq.s32.totalorder %s22, 1
    %p290 = por %p288, %p289
    %p291 = scmp.ne.s32.totalorder %s280, %s281
    %p292 = scmp.eq.s32.totalorder %s22, 0
    %p293 = por %p291, %p292
    %p294 = scmp.ne.s32.totalorder %s280, %s281
    %p295 = scmp.eq.s32.totalorder %s23, 1
    %p296 = por %p294, %p295
    %p298 = scmp.ne.s32.totalorder %s281, %s297
    %p299 = scmp.eq.s32.totalorder %s23, 0
    %p300 = por %p298, %p299
    %p301 = scmp.le.s32.totalorder 1, %s17
    %p302 = scmp.lt.s32.totalorder %s17, 3
    %p303 = pnand %p301, %p302
    %p304 = pneg %p303
    // Predicated region
    $region9: #{pointnet_forward.2} parent=5 // pred_check
      _
    $region10: #{pointnet_forward.2} parent=5 // pred_check_branch
      %306 = sbr.rel (%p303) target = $region12
    $region11: #{pointnet_forward.2} parent=5 // pred_region
      %s307 = ssub.s32 %s17, 1
      // Predicated region
      $region13: #{pointnet_forward.2} parent=11 // pred_check
        %p308 = pneg %p78
      $region14: #{pointnet_forward.2} parent=11 // pred_check_branch
        %310 = sbr.rel (%p308) target = $region16
      $region15: #{pointnet_forward.2} parent=11 // pred_region
        _
      $region16: #{pointnet_forward.2} parent=11 // pred_fallthru
        _
      // Predicated region
      $region17: #{pointnet_forward.2} parent=11 // pred_check
        %p311 = pneg %p99
      $region18: #{pointnet_forward.2} parent=11 // pred_check_branch
        %313 = sbr.rel (%p311) target = $region20
      $region19: #{pointnet_forward.2} parent=11 // pred_region
        _
      $region20: #{pointnet_forward.2} parent=11 // pred_fallthru
        _
      // Predicated region
      $region21: #{pointnet_forward.2} parent=11 // pred_check
        %p314 = pneg %p120
      $region22: #{pointnet_forward.2} parent=11 // pred_check_branch
        %316 = sbr.rel (%p314) target = $region24
      $region23: #{pointnet_forward.2} parent=11 // pred_region
        _
      $region24: #{pointnet_forward.2} parent=11 // pred_fallthru
        _
      // Predicated region
      $region25: #{pointnet_forward.2} parent=11 // pred_check
        %p317 = pneg %p141
      $region26: #{pointnet_forward.2} parent=11 // pred_check_branch
        %319 = sbr.rel (%p317) target = $region28
      $region27: #{pointnet_forward.2} parent=11 // pred_region
        _
      $region28: #{pointnet_forward.2} parent=11 // pred_fallthru
        _
      // Predicated region
      $region29: #{pointnet_forward.2} parent=11 // pred_check
        %p320 = pneg %p162
      $region30: #{pointnet_forward.2} parent=11 // pred_check_branch
        %322 = sbr.rel (%p320) target = $region32
      $region31: #{pointnet_forward.2} parent=11 // pred_region
        _
      $region32: #{pointnet_forward.2} parent=11 // pred_fallthru
        _
      // Predicated region
      $region33: #{pointnet_forward.2} parent=11 // pred_check
        %p323 = pneg %p183
      $region34: #{pointnet_forward.2} parent=11 // pred_check_branch
        %325 = sbr.rel (%p323) target = $region36
      $region35: #{pointnet_forward.2} parent=11 // pred_region
        _
      $region36: #{pointnet_forward.2} parent=11 // pred_fallthru
        _
      // Predicated region
      $region37: #{pointnet_forward.2} parent=11 // pred_check
        %p326 = pneg %p204
      $region38: #{pointnet_forward.2} parent=11 // pred_check_branch
        %328 = sbr.rel (%p326) target = $region40
      $region39: #{pointnet_forward.2} parent=11 // pred_region
        _
      $region40: #{pointnet_forward.2} parent=11 // pred_fallthru
        _
      // Predicated region
      $region41: #{pointnet_forward.2} parent=11 // pred_check
        %p329 = pneg %p225
      $region42: #{pointnet_forward.2} parent=11 // pred_check_branch
        %331 = sbr.rel (%p329) target = $region44
      $region43: #{pointnet_forward.2} parent=11 // pred_region
        _
      $region44: #{pointnet_forward.2} parent=11 // pred_fallthru
        _
      // Predicated region
      $region45: #{pointnet_forward.2} parent=11 // pred_check
        %p332 = pneg %p246
      $region46: #{pointnet_forward.2} parent=11 // pred_check_branch
        %334 = sbr.rel (%p332) target = $region48
      $region47: #{pointnet_forward.2} parent=11 // pred_region
        _
      $region48: #{pointnet_forward.2} parent=11 // pred_fallthru
        _
      // Predicated region
      $region49: #{pointnet_forward.2} parent=11 // pred_check
        %p335 = pneg %p267
      $region50: #{pointnet_forward.2} parent=11 // pred_check_branch
        %337 = sbr.rel (%p335) target = $region52
      $region51: #{pointnet_forward.2} parent=11 // pred_region
        _
      $region52: #{pointnet_forward.2} parent=11 // pred_fallthru
        _
    $region12: #{pointnet_forward.2} parent=5 // pred_fallthru
      _
    %p338 = scmp.lt.s32.totalorder %s17, 2
    // Predicated region
    $region53: #{pointnet_forward.2} parent=5 // pred_check
      %p339 = pneg %p338
    $region54: #{pointnet_forward.2} parent=5 // pred_check_branch
      %341 = sbr.rel (%p339) target = $region56
    $region55: #{pointnet_forward.2} parent=5 // pred_region
      // Predicated region
      $region57: #{pointnet_forward.2} parent=55 // pred_check
        %p342 = pneg %p51
      $region58: #{pointnet_forward.2} parent=55 // pred_check_branch
        %344 = sbr.rel (%p342) target = $region60
      $region59: #{pointnet_forward.2} parent=55 // pred_region
        %p345 = scmp.lt.s32.totalorder %s24, 1
        %s346 = scalar_select %p345, %s24, 1
        %p347 = scmp.lt.s32.totalorder %s25, 0
        %s348 = scalar_select %p347, %s25, 0
        %s349 = sadd.s32 %s348, %s346
        %s350 = smul.addr %s349, 2
        %s351 = scalar_lea.vmem %s0, %s350
      $region60: #{pointnet_forward.2} parent=55 // pred_fallthru
        _
    $region56: #{pointnet_forward.2} parent=5 // pred_fallthru
      _
    %p352 = scmp.le.s32.totalorder 1, %s17
    %p353 = scmp.lt.s32.totalorder %s17, 3
    %p354 = pnand %p352, %p353
    %p355 = pneg %p354
    // Predicated region
    $region61: #{pointnet_forward.2} parent=5 // pred_check
      _
    $region62: #{pointnet_forward.2} parent=5 // pred_check_branch
      %357 = sbr.rel (%p354) target = $region64
    $region63: #{pointnet_forward.2} parent=5 // pred_region
      %s358 = ssub.s32 %s17, 1
      %p359 = scmp.lt.s32.totalorder %s26, 1
      %s360 = scalar_select %p359, %s26, 1
      %p361 = scmp.lt.s32.totalorder %s27, 0
      %s362 = scalar_select %p361, %s27, 0
      %s363 = sadd.s32 %s362, %s360
      %s364 = smul.addr %s363, 2
      %s365 = scalar_lea.vmem %s0, %s364
      %p366 = pneg %p57
      %p367 = pneg %p54
      %p368 = pneg %p78
      %p369 = pneg %p75
      %p370 = pneg %p99
      %p371 = pneg %p96
      %p372 = pneg %p120
      %p373 = pneg %p117
      %p374 = pneg %p141
      %p375 = pneg %p138
      %p376 = pneg %p162
      %p377 = pneg %p159
      %p378 = pneg %p183
      %p379 = pneg %p180
      %p380 = pneg %p204
      %p381 = pneg %p201
      %p382 = pneg %p225
      %p383 = pneg %p222
      %p384 = pneg %p246
      %p385 = pneg %p243
      %p386 = pneg %p267
      %p387 = pneg %p264
      %p388 = pneg %p293
      %p389 = pneg %p290
      %p390 = scmp.lt.s32.totalorder %s26, 1
      %s391 = scalar_select %p390, %s26, 1
      %s392 = smul.addr %s391, 8
      %s393 = smul.addr %s392, 8
      %s394 = scalar_lea.vmem %s11, %s393
      %p395 = scmp.lt.s32.totalorder %s26, 1
      %s396 = scalar_select %p395, %s26, 1
      %p397 = scmp.lt.s32.totalorder %s27, 0
      %s398 = scalar_select %p397, %s27, 0
      %s399 = sadd.s32 %s398, %s396
      %s400 = smul.addr %s399, 2
      %s401 = scalar_lea.vmem %s0, %s400
      %p402 = scmp.lt.s32.totalorder %s26, 1
      %s403 = scalar_select %p402, %s26, 1
      %s404 = smul.addr %s403, 8
      %s405 = smul.addr %s404, 8
      %s406 = scalar_lea.vmem %s11, %s405
      %p408 = scmp.eq.s32.totalorder %s27, 0
      // Predicated region
      $region65: #{pointnet_forward.2} parent=63 // pred_check
        %p409 = pneg %p408
      $region66: #{pointnet_forward.2} parent=63 // pred_check_branch
        %411 = sbr.rel (%p409) target = $region68
      $region67: #{pointnet_forward.2} parent=63 // pred_region
        %vm412 = vcmask 7168
        %413 = vst.msk [vmem:[%s406] sm:$0xff] %vm412, -inf
        %414 = vst.msk [vmem:[%s406 + $0x8] sm:$0xff] %vm412, -inf
        %415 = vst.msk [vmem:[%s406 + $0x10] sm:$0xff] %vm412, -inf
        %416 = vst.msk [vmem:[%s406 + $0x18] sm:$0xff] %vm412, -inf
        %417 = vst.msk [vmem:[%s406 + $0x20] sm:$0xff] %vm412, -inf
        %418 = vst.msk [vmem:[%s406 + $0x28] sm:$0xff] %vm412, -inf
        %419 = vst.msk [vmem:[%s406 + $0x30] sm:$0xff] %vm412, -inf
        %420 = vst.msk [vmem:[%s406 + $0x38] sm:$0xff] %vm412, -inf
      $region68: #{pointnet_forward.2} parent=63 // pred_fallthru
        _
      %v421 = vld [vmem:[%s401] sm:$0x3]
      %v422 = vld [vmem:[%s1] sm:$0xf]
      %v423 = vld [vmem:[%s1 + $0x4] sm:$0xf]
      %v424 = vld [vmem:[%s1 + $0x8] sm:$0xf]
      %v425 = vld [vmem:[%s1 + $0xc] sm:$0xf]
      %v426 = vld [vmem:[%s1 + $0x10] sm:$0xf]
      %v427 = vld [vmem:[%s1 + $0x14] sm:$0xf]
      %v428 = vld [vmem:[%s1 + $0x18] sm:$0xf]
      %v429 = vld [vmem:[%s1 + $0x1c] sm:$0xf]
      %v430 = vld [vmem:[%s2] sm:$0xff]
      %v431 = vld [vmem:[%s2 + $0x8] sm:$0xff]
      %v432 = vld [vmem:[%s2 + $0x10] sm:$0xff]
      %v433 = vld [vmem:[%s2 + $0x18] sm:$0xff]
      %v434 = vld [vmem:[%s2 + $0x20] sm:$0xff]
      %v435 = vld [vmem:[%s2 + $0x28] sm:$0xff]
      %v436 = vld [vmem:[%s2 + $0x30] sm:$0xff]
      %v437 = vld [vmem:[%s2 + $0x38] sm:$0xff]
      %439 = vset.pattern.permute.xlu0 0
      %440 = vperm.xlu0 %439, %v430
      %v441 = vpop.permute.xlu0 %440
      %444 = vset.pattern.permute.xlu0 0
      %445 = vperm.xlu0 %444, %v431
      %v446 = vpop.permute.xlu0 %445
      %449 = vset.pattern.permute.xlu0 0
      %450 = vperm.xlu0 %449, %v432
      %v451 = vpop.permute.xlu0 %450
      %454 = vset.pattern.permute.xlu0 0
      %455 = vperm.xlu0 %454, %v433
      %v456 = vpop.permute.xlu0 %455
      %459 = vset.pattern.permute.xlu0 0
      %460 = vperm.xlu0 %459, %v434
      %v461 = vpop.permute.xlu0 %460
      %464 = vset.pattern.permute.xlu0 0
      %465 = vperm.xlu0 %464, %v435
      %v466 = vpop.permute.xlu0 %465
      %469 = vset.pattern.permute.xlu0 0
      %470 = vperm.xlu0 %469, %v436
      %v471 = vpop.permute.xlu0 %470
      %474 = vset.pattern.permute.xlu0 0
      %475 = vperm.xlu0 %474, %v437
      %v476 = vpop.permute.xlu0 %475
      %v486 = vunpack.c.l.b16 %v422
      %v487 = vunpack.c.l.b16 %v423
      %v488 = vunpack.c.l.b16 %v424
      %v489 = vunpack.c.l.b16 %v425
      %v490 = vunpack.c.l.b16 %v426
      %v491 = vunpack.c.l.b16 %v427
      %v492 = vunpack.c.l.b16 %v428
      %v493 = vunpack.c.l.b16 %v429
      %v494 = vpack.c.b16 %v487, %v486
      %v495 = vpack.c.b16 %v489, %v488
      %v496 = vpack.c.b16 %v491, %v490
      %v497 = vpack.c.b16 %v493, %v492
      %vm498 = vcmask 23552
      %v500 = vsel %vm498, %v494, 0
      %v503 = vsel %vm498, %v495, 0
      %v506 = vsel %vm498, %v496, 0
      %v509 = vsel %vm498, %v497, 0
      %vm511 = vcmask 1040384
      %vm512 = vcmask 1041408
      %v513 = vsel %vm511, 4294967295, 65535
      %v514 = vsel %vm512, %v513, 0
      %v516 = vand.u32 %v421, %v514
      %518 = vmatprep.subr.bf16.mxu0 0
      %519 = vmatpush1.bf16.msra.mxu0 %v516
      %520 = vmatprep.subr.bf16.mxu0 0
      %521 = vmatpush1.bf16.msra.mxu0 0
      %522 = vmatprep.subr.bf16.mxu0 0
      %523 = vmatpush1.bf16.msra.mxu0 0
      %524 = vmatprep.subr.bf16.mxu0 0
      %525 = vmatpush1.bf16.msra.mxu0 0
      %526 = vmatprep.subr.bf16.mxu0 0
      %527 = vmatpush1.bf16.msra.mxu0 0
      %528 = vmatprep.subr.bf16.mxu0 0
      %529 = vmatpush1.bf16.msra.mxu0 0
      %530 = vmatprep.subr.bf16.mxu0 0
      %531 = vmatpush1.bf16.msra.mxu0 0
      %532 = vmatprep.subr.bf16.mxu0 0
      %533 = vmatpush1.bf16.msra.mxu0 0
      %534 = vmatprep.subr.bf16.mxu0 0
      %535 = vmatpush1.bf16.msra.mxu0 0
      %536 = vmatprep.subr.bf16.mxu0 0
      %537 = vmatpush1.bf16.msra.mxu0 0
      %538 = vmatprep.subr.bf16.mxu0 0
      %539 = vmatpush1.bf16.msra.mxu0 0
      %540 = vmatprep.subr.bf16.mxu0 0
      %541 = vmatpush1.bf16.msra.mxu0 0
      %542 = vmatprep.subr.bf16.mxu0 0
      %543 = vmatpush1.bf16.msra.mxu0 0
      %544 = vmatprep.subr.bf16.mxu0 0
      %545 = vmatpush1.bf16.msra.mxu0 0
      %546 = vmatprep.subr.bf16.mxu0 0
      %547 = vmatpush1.bf16.msra.mxu0 0
      %548 = vmatprep.subr.bf16.mxu0 0
      %549 = vmatpush1.bf16.msra.mxu0 0
      %550 = vmatprep.mubr.bf16.mxu0 0
      %551 = vmatmul.mubr.bf16.gmra.mrb[0].mxu0 %v500
      %v552 = vpop.f32.mrb[0].mxu0
      %v553 = vadd.f32 %v441, %v552
      %v554 = vpop.f32.mrb[0].mxu0
      %v555 = vpop.f32.mrb[0].mxu0
      %v556 = vadd.f32 %v446, %v555
      %v557 = vpop.f32.mrb[0].mxu0
      %558 = vmatprep.mubr.bf16.mxu0 0
      %559 = vmatmul.mubr.bf16.gmra.mrb[0].mxu0 %v503
      %v560 = vpop.f32.mrb[0].mxu0
      %v561 = vadd.f32 %v451, %v560
      %v562 = vpop.f32.mrb[0].mxu0
      %v563 = vpop.f32.mrb[0].mxu0
      %v564 = vadd.f32 %v456, %v563
      %v565 = vpop.f32.mrb[0].mxu0
      %566 = vmatprep.mubr.bf16.mxu0 0
      %567 = vmatmul.mubr.bf16.gmra.mrb[0].mxu0 %v506
      %v568 = vpop.f32.mrb[0].mxu0
      %v569 = vadd.f32 %v461, %v568
      %v570 = vpop.f32.mrb[0].mxu0
      %v571 = vpop.f32.mrb[0].mxu0
      %v572 = vadd.f32 %v466, %v571
      %v573 = vpop.f32.mrb[0].mxu0
      %574 = vmatprep.mubr.bf16.mxu0 0
      %575 = vmatmul.mubr.bf16.gmra.mrb[0].mxu0 %v509
      %v576 = vpop.f32.mrb[0].mxu0
      %v577 = vadd.f32 %v471, %v576
      %v578 = vpop.f32.mrb[0].mxu0
      %v579 = vpop.f32.mrb[0].mxu0
      %v580 = vadd.f32 %v476, %v579
      %v581 = vpop.f32.mrb[0].mxu0
      %582 = vdwg.mxu0
      %v583 = vmax.f32 %v553, 0.0
      %v584 = vmax.f32 %v556, 0.0
      %v585 = vmax.f32 %v561, 0.0
      %v586 = vmax.f32 %v564, 0.0
      %v587 = vmax.f32 %v569, 0.0
      %v588 = vmax.f32 %v572, 0.0
      %v589 = vmax.f32 %v577, 0.0
      %v590 = vmax.f32 %v580, 0.0
      %v591 = vpack.c.bf16 %v584, %v583
      %v592 = vpack.c.bf16 %v586, %v585
      %v593 = vpack.c.bf16 %v588, %v587
      %v594 = vpack.c.bf16 %v590, %v589
      %v595 = vld [vmem:[%s3] sm:$0xf]
      %v596 = vld [vmem:[%s3 + $0x4] sm:$0xf]
      %v597 = vld [vmem:[%s3 + $0x8] sm:$0xf]
      %v598 = vld [vmem:[%s3 + $0xc] sm:$0xf]
      %v599 = vld [vmem:[%s3 + $0x10] sm:$0xf]
      %v600 = vld [vmem:[%s3 + $0x14] sm:$0xf]
      %v601 = vld [vmem:[%s3 + $0x18] sm:$0xf]
      %v602 = vld [vmem:[%s3 + $0x1c] sm:$0xf]
      %v603 = vld [vmem:[%s4] sm:$0xff]
      %v604 = vld [vmem:[%s4 + $0x8] sm:$0xff]
      %v605 = vld [vmem:[%s4 + $0x10] sm:$0xff]
      %v606 = vld [vmem:[%s4 + $0x18] sm:$0xff]
      %v607 = vld [vmem:[%s4 + $0x20] sm:$0xff]
      %v608 = vld [vmem:[%s4 + $0x28] sm:$0xff]
      %v609 = vld [vmem:[%s4 + $0x30] sm:$0xff]
      %v610 = vld [vmem:[%s4 + $0x38] sm:$0xff]
      %612 = vset.pattern.permute.xlu0 0
      %613 = vperm.xlu0 %612, %v603
      %v614 = vpop.permute.xlu0 %613
      %617 = vset.pattern.permute.xlu0 0
      %618 = vperm.xlu0 %617, %v604
      %v619 = vpop.permute.xlu0 %618
      %622 = vset.pattern.permute.xlu0 0
      %623 = vperm.xlu0 %622, %v605
      %v624 = vpop.permute.xlu0 %623
      %627 = vset.pattern.permute.xlu0 0
      %628 = vperm.xlu0 %627, %v606
      %v629 = vpop.permute.xlu0 %628
      %632 = vset.pattern.permute.xlu0 0
      %633 = vperm.xlu0 %632, %v607
      %v634 = vpop.permute.xlu0 %633
      %637 = vset.pattern.permute.xlu0 0
      %638 = vperm.xlu0 %637, %v608
      %v639 = vpop.permute.xlu0 %638
      %642 = vset.pattern.permute.xlu0 0
      %643 = vperm.xlu0 %642, %v609
      %v644 = vpop.permute.xlu0 %643
      %647 = vset.pattern.permute.xlu0 0
      %648 = vperm.xlu0 %647, %v610
      %v649 = vpop.permute.xlu0 %648
      %v659 = vunpack.c.l.b16 %v595
      %v660 = vunpack.c.l.b16 %v596
      %v661 = vunpack.c.l.b16 %v597
      %v662 = vunpack.c.l.b16 %v598
      %v663 = vunpack.c.l.b16 %v599
      %v664 = vunpack.c.l.b16 %v600
      %v665 = vunpack.c.l.b16 %v601
      %v666 = vunpack.c.l.b16 %v602
      %v667 = vpack.c.b16 %v660, %v659
      %v668 = vpack.c.b16 %v662, %v661
      %v669 = vpack.c.b16 %v664, %v663
      %v670 = vpack.c.b16 %v666, %v665
      %vm671 = vcmask 523264
      %v673 = vsel %vm671, %v667, 0
      %v676 = vsel %vm671, %v668, 0
      %v679 = vsel %vm671, %v669, 0
      %v682 = vsel %vm671, %v670, 0
      %684 = vmatprep.subr.bf16.mxu0 0
      %685 = vmatpush1.bf16.msra.mxu0 %v591
      %686 = vmatprep.subr.bf16.mxu0 0
      %687 = vmatpush1.bf16.msra.mxu0 %v592
      %688 = vmatprep.subr.bf16.mxu0 0
      %689 = vmatpush1.bf16.msra.mxu0 %v593
      %690 = vmatprep.subr.bf16.mxu0 0
      %691 = vmatpush1.bf16.msra.mxu0 %v594
      %692 = vmatprep.subr.bf16.mxu0 0
      %693 = vmatpush1.bf16.msra.mxu0 0
      %694 = vmatprep.subr.bf16.mxu0 0
      %695 = vmatpush1.bf16.msra.mxu0 0
      %696 = vmatprep.subr.bf16.mxu0 0
      %697 = vmatpush1.bf16.msra.mxu0 0
      %698 = vmatprep.subr.bf16.mxu0 0
      %699 = vmatpush1.bf16.msra.mxu0 0
      %700 = vmatprep.subr.bf16.mxu0 0
      %701 = vmatpush1.bf16.msra.mxu0 0
      %702 = vmatprep.subr.bf16.mxu0 0
      %703 = vmatpush1.bf16.msra.mxu0 0
      %704 = vmatprep.subr.bf16.mxu0 0
      %705 = vmatpush1.bf16.msra.mxu0 0
      %706 = vmatprep.subr.bf16.mxu0 0
      %707 = vmatpush1.bf16.msra.mxu0 0
      %708 = vmatprep.subr.bf16.mxu0 0
      %709 = vmatpush1.bf16.msra.mxu0 0
      %710 = vmatprep.subr.bf16.mxu0 0
      %711 = vmatpush1.bf16.msra.mxu0 0
      %712 = vmatprep.subr.bf16.mxu0 0
      %713 = vmatpush1.bf16.msra.mxu0 0
      %714 = vmatprep.subr.bf16.mxu0 0
      %715 = vmatpush1.bf16.msra.mxu0 0
      %716 = vmatprep.mubr.bf16.mxu0 0
      %717 = vmatmul.mubr.bf16.gmra.mrb[0].mxu0 %v673
      %v718 = vpop.f32.mrb[0].mxu0
      %v719 = vadd.f32 %v614, %v718
      %v720 = vpop.f32.mrb[0].mxu0
      %v721 = vpop.f32.mrb[0].mxu0
      %v722 = vadd.f32 %v619, %v721
      %v723 = vpop.f32.mrb[0].mxu0
      %724 = vmatprep.mubr.bf16.mxu0 0
      %725 = vmatmul.mubr.bf16.gmra.mrb[0].mxu0 %v676
      %v726 = vpop.f32.mrb[0].mxu0
      %v727 = vadd.f32 %v624, %v726
      %v728 = vpop.f32.mrb[0].mxu0
      %v729 = vpop.f32.mrb[0].mxu0
      %v730 = vadd.f32 %v629, %v729
      %v731 = vpop.f32.mrb[0].mxu0
      %732 = vmatprep.mubr.bf16.mxu0 0
      %733 = vmatmul.mubr.bf16.gmra.mrb[0].mxu0 %v679
      %v734 = vpop.f32.mrb[0].mxu0
      %v735 = vadd.f32 %v634, %v734
      %v736 = vpop.f32.mrb[0].mxu0
      %v737 = vpop.f32.mrb[0].mxu0
      %v738 = vadd.f32 %v639, %v737
      %v739 = vpop.f32.mrb[0].mxu0
      %740 = vmatprep.mubr.bf16.mxu0 0
      %741 = vmatmul.mubr.bf16.gmra.mrb[0].mxu0 %v682
      %v742 = vpop.f32.mrb[0].mxu0
      %v743 = vadd.f32 %v644, %v742
      %v744 = vpop.f32.mrb[0].mxu0
      %v745 = vpop.f32.mrb[0].mxu0
      %v746 = vadd.f32 %v649, %v745
      %v747 = vpop.f32.mrb[0].mxu0
      %748 = vdwg.mxu0
      %v749 = vmax.f32 %v719, 0.0
      %v750 = vmax.f32 %v722, 0.0
      %v751 = vmax.f32 %v727, 0.0
      %v752 = vmax.f32 %v730, 0.0
      %v753 = vmax.f32 %v735, 0.0
      %v754 = vmax.f32 %v738, 0.0
      %v755 = vmax.f32 %v743, 0.0
      %v756 = vmax.f32 %v746, 0.0
      %v757 = vpack.c.bf16 %v750, %v749
      %v758 = vpack.c.bf16 %v752, %v751
      %v759 = vpack.c.bf16 %v754, %v753
      %v760 = vpack.c.bf16 %v756, %v755
      %v761 = vld [vmem:[%s5] sm:$0xf]
      %v762 = vld [vmem:[%s5 + $0x4] sm:$0xf]
      %v763 = vld [vmem:[%s5 + $0x8] sm:$0xf]
      %v764 = vld [vmem:[%s5 + $0xc] sm:$0xf]
      %v765 = vld [vmem:[%s5 + $0x10] sm:$0xf]
      %v766 = vld [vmem:[%s5 + $0x14] sm:$0xf]
      %v767 = vld [vmem:[%s5 + $0x18] sm:$0xf]
      %v768 = vld [vmem:[%s5 + $0x1c] sm:$0xf]
      %v769 = vld [vmem:[%s6] sm:$0xff]
      %v770 = vld [vmem:[%s6 + $0x8] sm:$0xff]
      %v771 = vld [vmem:[%s6 + $0x10] sm:$0xff]
      %v772 = vld [vmem:[%s6 + $0x18] sm:$0xff]
      %v773 = vld [vmem:[%s6 + $0x20] sm:$0xff]
      %v774 = vld [vmem:[%s6 + $0x28] sm:$0xff]
      %v775 = vld [vmem:[%s6 + $0x30] sm:$0xff]
      %v776 = vld [vmem:[%s6 + $0x38] sm:$0xff]
      %778 = vset.pattern.permute.xlu0 0
      %779 = vperm.xlu0 %778, %v769
      %v780 = vpop.permute.xlu0 %779
      %783 = vset.pattern.permute.xlu0 0
      %784 = vperm.xlu0 %783, %v770
      %v785 = vpop.permute.xlu0 %784
      %788 = vset.pattern.permute.xlu0 0
      %789 = vperm.xlu0 %788, %v771
      %v790 = vpop.permute.xlu0 %789
      %793 = vset.pattern.permute.xlu0 0
      %794 = vperm.xlu0 %793, %v772
      %v795 = vpop.permute.xlu0 %794
      %798 = vset.pattern.permute.xlu0 0
      %799 = vperm.xlu0 %798, %v773
      %v800 = vpop.permute.xlu0 %799
      %803 = vset.pattern.permute.xlu0 0
      %804 = vperm.xlu0 %803, %v774
      %v805 = vpop.permute.xlu0 %804
      %808 = vset.pattern.permute.xlu0 0
      %809 = vperm.xlu0 %808, %v775
      %v810 = vpop.permute.xlu0 %809
      %813 = vset.pattern.permute.xlu0 0
      %814 = vperm.xlu0 %813, %v776
      %v815 = vpop.permute.xlu0 %814
      %v825 = vunpack.c.l.b16 %v761
      %v826 = vunpack.c.l.b16 %v762
      %v827 = vunpack.c.l.b16 %v763
      %v828 = vunpack.c.l.b16 %v764
      %v829 = vunpack.c.l.b16 %v765
      %v830 = vunpack.c.l.b16 %v766
      %v831 = vunpack.c.l.b16 %v767
      %v832 = vunpack.c.l.b16 %v768
      %v833 = vpack.c.b16 %v826, %v825
      %v834 = vpack.c.b16 %v828, %v827
      %v835 = vpack.c.b16 %v830, %v829
      %v836 = vpack.c.b16 %v832, %v831
      %v838 = vsel %vm671, %v833, 0
      %v841 = vsel %vm671, %v834, 0
      %v844 = vsel %vm671, %v835, 0
      %v847 = vsel %vm671, %v836, 0
      %849 = vmatprep.subr.bf16.mxu0 0
      %850 = vmatpush1.bf16.msra.mxu0 %v757
      %851 = vmatprep.subr.bf16.mxu0 0
      %852 = vmatpush1.bf16.msra.mxu0 %v758
      %853 = vmatprep.subr.bf16.mxu0 0
      %854 = vmatpush1.bf16.msra.mxu0 %v759
      %855 = vmatprep.subr.bf16.mxu0 0
      %856 = vmatpush1.bf16.msra.mxu0 %v760
      %857 = vmatprep.subr.bf16.mxu0 0
      %858 = vmatpush1.bf16.msra.mxu0 0
      %859 = vmatprep.subr.bf16.mxu0 0
      %860 = vmatpush1.bf16.msra.mxu0 0
      %861 = vmatprep.subr.bf16.mxu0 0
      %862 = vmatpush1.bf16.msra.mxu0 0
      %863 = vmatprep.subr.bf16.mxu0 0
      %864 = vmatpush1.bf16.msra.mxu0 0
      %865 = vmatprep.subr.bf16.mxu0 0
      %866 = vmatpush1.bf16.msra.mxu0 0
      %867 = vmatprep.subr.bf16.mxu0 0
      %868 = vmatpush1.bf16.msra.mxu0 0
      %869 = vmatprep.subr.bf16.mxu0 0
      %870 = vmatpush1.bf16.msra.mxu0 0
      %871 = vmatprep.subr.bf16.mxu0 0
      %872 = vmatpush1.bf16.msra.mxu0 0
      %873 = vmatprep.subr.bf16.mxu0 0
      %874 = vmatpush1.bf16.msra.mxu0 0
      %875 = vmatprep.subr.bf16.mxu0 0
      %876 = vmatpush1.bf16.msra.mxu0 0
      %877 = vmatprep.subr.bf16.mxu0 0
      %878 = vmatpush1.bf16.msra.mxu0 0
      %879 = vmatprep.subr.bf16.mxu0 0
      %880 = vmatpush1.bf16.msra.mxu0 0
      %881 = vmatprep.mubr.bf16.mxu0 0
      %882 = vmatmul.mubr.bf16.gmra.mrb[0].mxu0 %v838
      %v883 = vpop.f32.mrb[0].mxu0
      %v884 = vadd.f32 %v780, %v883
      %v885 = vpop.f32.mrb[0].mxu0
      %v886 = vpop.f32.mrb[0].mxu0
      %v887 = vadd.f32 %v785, %v886
      %v888 = vpop.f32.mrb[0].mxu0
      %889 = vmatprep.mubr.bf16.mxu0 0
      %890 = vmatmul.mubr.bf16.gmra.mrb[0].mxu0 %v841
      %v891 = vpop.f32.mrb[0].mxu0
      %v892 = vadd.f32 %v790, %v891
      %v893 = vpop.f32.mrb[0].mxu0
      %v894 = vpop.f32.mrb[0].mxu0
      %v895 = vadd.f32 %v795, %v894
      %v896 = vpop.f32.mrb[0].mxu0
      %897 = vmatprep.mubr.bf16.mxu0 0
      %898 = vmatmul.mubr.bf16.gmra.mrb[0].mxu0 %v844
      %v899 = vpop.f32.mrb[0].mxu0
      %v900 = vadd.f32 %v800, %v899
      %v901 = vpop.f32.mrb[0].mxu0
      %v902 = vpop.f32.mrb[0].mxu0
      %v903 = vadd.f32 %v805, %v902
      %v904 = vpop.f32.mrb[0].mxu0
      %905 = vmatprep.mubr.bf16.mxu0 0
      %906 = vmatmul.mubr.bf16.gmra.mrb[0].mxu0 %v847
      %v907 = vpop.f32.mrb[0].mxu0
      %v908 = vadd.f32 %v810, %v907
      %v909 = vpop.f32.mrb[0].mxu0
      %v910 = vpop.f32.mrb[0].mxu0
      %v911 = vadd.f32 %v815, %v910
      %v912 = vpop.f32.mrb[0].mxu0
      %913 = vdwg.mxu0
      %v914 = vmax.f32 %v884, 0.0
      %v915 = vmax.f32 %v887, 0.0
      %v916 = vmax.f32 %v892, 0.0
      %v917 = vmax.f32 %v895, 0.0
      %v918 = vmax.f32 %v900, 0.0
      %v919 = vmax.f32 %v903, 0.0
      %v920 = vmax.f32 %v908, 0.0
      %v921 = vmax.f32 %v911, 0.0
      %v922 = vpack.c.bf16 %v915, %v914
      %v923 = vpack.c.bf16 %v917, %v916
      %v924 = vpack.c.bf16 %v919, %v918
      %v925 = vpack.c.bf16 %v921, %v920
      %v926 = vld [vmem:[%s7] sm:$0xf]
      %v927 = vld [vmem:[%s7 + $0x4] sm:$0xf]
      %v928 = vld [vmem:[%s7 + $0x8] sm:$0xf]
      %v929 = vld [vmem:[%s7 + $0xc] sm:$0xf]
      %v930 = vld [vmem:[%s7 + $0x10] sm:$0xf]
      %v931 = vld [vmem:[%s7 + $0x14] sm:$0xf]
      %v932 = vld [vmem:[%s7 + $0x18] sm:$0xf]
      %v933 = vld [vmem:[%s7 + $0x1c] sm:$0xf]
      %v934 = vld [vmem:[%s7 + $0x20] sm:$0xf]
      %v935 = vld [vmem:[%s7 + $0x24] sm:$0xf]
      %v936 = vld [vmem:[%s7 + $0x28] sm:$0xf]
      %v937 = vld [vmem:[%s7 + $0x2c] sm:$0xf]
      %v938 = vld [vmem:[%s7 + $0x30] sm:$0xf]
      %v939 = vld [vmem:[%s7 + $0x34] sm:$0xf]
      %v940 = vld [vmem:[%s7 + $0x38] sm:$0xf]
      %v941 = vld [vmem:[%s7 + $0x3c] sm:$0xf]
      %v942 = vld [vmem:[%s8] sm:$0xff]
      %v943 = vld [vmem:[%s8 + $0x8] sm:$0xff]
      %v944 = vld [vmem:[%s8 + $0x10] sm:$0xff]
      %v945 = vld [vmem:[%s8 + $0x18] sm:$0xff]
      %v946 = vld [vmem:[%s8 + $0x20] sm:$0xff]
      %v947 = vld [vmem:[%s8 + $0x28] sm:$0xff]
      %v948 = vld [vmem:[%s8 + $0x30] sm:$0xff]
      %v949 = vld [vmem:[%s8 + $0x38] sm:$0xff]
      %v950 = vld [vmem:[%s8 + $0x40] sm:$0xff]
      %v951 = vld [vmem:[%s8 + $0x48] sm:$0xff]
      %v952 = vld [vmem:[%s8 + $0x50] sm:$0xff]
      %v953 = vld [vmem:[%s8 + $0x58] sm:$0xff]
      %v954 = vld [vmem:[%s8 + $0x60] sm:$0xff]
      %v955 = vld [vmem:[%s8 + $0x68] sm:$0xff]
      %v956 = vld [vmem:[%s8 + $0x70] sm:$0xff]
      %v957 = vld [vmem:[%s8 + $0x78] sm:$0xff]
      %959 = vset.pattern.permute.xlu0 0
      %960 = vperm.xlu0 %959, %v942
      %v961 = vpop.permute.xlu0 %960
      %964 = vset.pattern.permute.xlu0 0
      %965 = vperm.xlu0 %964, %v943
      %v966 = vpop.permute.xlu0 %965
      %969 = vset.pattern.permute.xlu0 0
      %970 = vperm.xlu0 %969, %v944
      %v971 = vpop.permute.xlu0 %970
      %974 = vset.pattern.permute.xlu0 0
      %975 = vperm.xlu0 %974, %v945
      %v976 = vpop.permute.xlu0 %975
      %979 = vset.pattern.permute.xlu0 0
      %980 = vperm.xlu0 %979, %v946
      %v981 = vpop.permute.xlu0 %980
      %984 = vset.pattern.permute.xlu0 0
      %985 = vperm.xlu0 %984, %v947
      %v986 = vpop.permute.xlu0 %985
      %989 = vset.pattern.permute.xlu0 0
      %990 = vperm.xlu0 %989, %v948
      %v991 = vpop.permute.xlu0 %990
      %994 = vset.pattern.permute.xlu0 0
      %995 = vperm.xlu0 %994, %v949
      %v996 = vpop.permute.xlu0 %995
      %999 = vset.pattern.permute.xlu0 0
      %1000 = vperm.xlu0 %999, %v950
      %v1001 = vpop.permute.xlu0 %1000
      %1004 = vset.pattern.permute.xlu0 0
      %1005 = vperm.xlu0 %1004, %v951
      %v1006 = vpop.permute.xlu0 %1005
      %1009 = vset.pattern.permute.xlu0 0
      %1010 = vperm.xlu0 %1009, %v952
      %v1011 = vpop.permute.xlu0 %1010
      %1014 = vset.pattern.permute.xlu0 0
      %1015 = vperm.xlu0 %1014, %v953
      %v1016 = vpop.permute.xlu0 %1015
      %1019 = vset.pattern.permute.xlu0 0
      %1020 = vperm.xlu0 %1019, %v954
      %v1021 = vpop.permute.xlu0 %1020
      %1024 = vset.pattern.permute.xlu0 0
      %1025 = vperm.xlu0 %1024, %v955
      %v1026 = vpop.permute.xlu0 %1025
      %1029 = vset.pattern.permute.xlu0 0
      %1030 = vperm.xlu0 %1029, %v956
      %v1031 = vpop.permute.xlu0 %1030
      %1034 = vset.pattern.permute.xlu0 0
      %1035 = vperm.xlu0 %1034, %v957
      %v1036 = vpop.permute.xlu0 %1035
      %v1054 = vunpack.c.l.b16 %v926
      %v1055 = vunpack.c.l.b16 %v927
      %v1056 = vunpack.c.l.b16 %v928
      %v1057 = vunpack.c.l.b16 %v929
      %v1058 = vunpack.c.l.b16 %v930
      %v1059 = vunpack.c.l.b16 %v931
      %v1060 = vunpack.c.l.b16 %v932
      %v1061 = vunpack.c.l.b16 %v933
      %v1062 = vunpack.c.l.b16 %v934
      %v1063 = vunpack.c.l.b16 %v935
      %v1064 = vunpack.c.l.b16 %v936
      %v1065 = vunpack.c.l.b16 %v937
      %v1066 = vunpack.c.l.b16 %v938
      %v1067 = vunpack.c.l.b16 %v939
      %v1068 = vunpack.c.l.b16 %v940
      %v1069 = vunpack.c.l.b16 %v941
      %v1070 = vpack.c.b16 %v1055, %v1054
      %v1071 = vpack.c.b16 %v1057, %v1056
      %v1072 = vpack.c.b16 %v1059, %v1058
      %v1073 = vpack.c.b16 %v1061, %v1060
      %v1074 = vpack.c.b16 %v1063, %v1062
      %v1075 = vpack.c.b16 %v1065, %v1064
      %v1076 = vpack.c.b16 %v1067, %v1066
      %v1077 = vpack.c.b16 %v1069, %v1068
      %v1079 = vsel %vm671, %v1070, 0
      %v1082 = vsel %vm671, %v1071, 0
      %v1085 = vsel %vm671, %v1072, 0
      %v1088 = vsel %vm671, %v1073, 0
      %v1091 = vsel %vm671, %v1074, 0
      %v1094 = vsel %vm671, %v1075, 0
      %v1097 = vsel %vm671, %v1076, 0
      %v1100 = vsel %vm671, %v1077, 0
      %1102 = vmatprep.subr.bf16.mxu0 0
      %1103 = vmatpush1.bf16.msra.mxu0 %v922
      %1104 = vmatprep.subr.bf16.mxu0 0
      %1105 = vmatpush1.bf16.msra.mxu0 %v923
      %1106 = vmatprep.subr.bf16.mxu0 0
      %1107 = vmatpush1.bf16.msra.mxu0 %v924
      %1108 = vmatprep.subr.bf16.mxu0 0
      %1109 = vmatpush1.bf16.msra.mxu0 %v925
      %1110 = vmatprep.subr.bf16.mxu0 0
      %1111 = vmatpush1.bf16.msra.mxu0 0
      %1112 = vmatprep.subr.bf16.mxu0 0
      %1113 = vmatpush1.bf16.msra.mxu0 0
      %1114 = vmatprep.subr.bf16.mxu0 0
      %1115 = vmatpush1.bf16.msra.mxu0 0
      %1116 = vmatprep.subr.bf16.mxu0 0
      %1117 = vmatpush1.bf16.msra.mxu0 0
      %1118 = vmatprep.subr.bf16.mxu0 0
      %1119 = vmatpush1.bf16.msra.mxu0 0
      %1120 = vmatprep.subr.bf16.mxu0 0
      %1121 = vmatpush1.bf16.msra.mxu0 0
      %1122 = vmatprep.subr.bf16.mxu0 0
      %1123 = vmatpush1.bf16.msra.mxu0 0
      %1124 = vmatprep.subr.bf16.mxu0 0
      %1125 = vmatpush1.bf16.msra.mxu0 0
      %1126 = vmatprep.subr.bf16.mxu0 0
      %1127 = vmatpush1.bf16.msra.mxu0 0
      %1128 = vmatprep.subr.bf16.mxu0 0
      %1129 = vmatpush1.bf16.msra.mxu0 0
      %1130 = vmatprep.subr.bf16.mxu0 0
      %1131 = vmatpush1.bf16.msra.mxu0 0
      %1132 = vmatprep.subr.bf16.mxu0 0
      %1133 = vmatpush1.bf16.msra.mxu0 0
      %1134 = vmatprep.mubr.bf16.mxu0 0
      %1135 = vmatmul.mubr.bf16.gmra.mrb[0].mxu0 %v1079
      %v1136 = vpop.f32.mrb[0].mxu0
      %v1137 = vadd.f32 %v961, %v1136
      %v1138 = vpop.f32.mrb[0].mxu0
      %v1139 = vpop.f32.mrb[0].mxu0
      %v1140 = vadd.f32 %v966, %v1139
      %v1141 = vpop.f32.mrb[0].mxu0
      %1142 = vmatprep.mubr.bf16.mxu0 0
      %1143 = vmatmul.mubr.bf16.gmra.mrb[0].mxu0 %v1082
      %v1144 = vpop.f32.mrb[0].mxu0
      %v1145 = vadd.f32 %v971, %v1144
      %v1146 = vpop.f32.mrb[0].mxu0
      %v1147 = vpop.f32.mrb[0].mxu0
      %v1148 = vadd.f32 %v976, %v1147
      %v1149 = vpop.f32.mrb[0].mxu0
      %1150 = vmatprep.mubr.bf16.mxu0 0
      %1151 = vmatmul.mubr.bf16.gmra.mrb[0].mxu0 %v1085
      %v1152 = vpop.f32.mrb[0].mxu0
      %v1153 = vadd.f32 %v981, %v1152
      %v1154 = vpop.f32.mrb[0].mxu0
      %v1155 = vpop.f32.mrb[0].mxu0
      %v1156 = vadd.f32 %v986, %v1155
      %v1157 = vpop.f32.mrb[0].mxu0
      %1158 = vmatprep.mubr.bf16.mxu0 0
      %1159 = vmatmul.mubr.bf16.gmra.mrb[0].mxu0 %v1088
      %v1160 = vpop.f32.mrb[0].mxu0
      %v1161 = vadd.f32 %v991, %v1160
      %v1162 = vpop.f32.mrb[0].mxu0
      %v1163 = vpop.f32.mrb[0].mxu0
      %v1164 = vadd.f32 %v996, %v1163
      %v1165 = vpop.f32.mrb[0].mxu0
      %1166 = vmatprep.mubr.bf16.mxu0 0
      %1167 = vmatmul.mubr.bf16.gmra.mrb[0].mxu0 %v1091
      %v1168 = vpop.f32.mrb[0].mxu0
      %v1169 = vadd.f32 %v1001, %v1168
      %v1170 = vpop.f32.mrb[0].mxu0
      %v1171 = vpop.f32.mrb[0].mxu0
      %v1172 = vadd.f32 %v1006, %v1171
      %v1173 = vpop.f32.mrb[0].mxu0
      %1174 = vmatprep.mubr.bf16.mxu0 0
      %1175 = vmatmul.mubr.bf16.gmra.mrb[0].mxu0 %v1094
      %v1176 = vpop.f32.mrb[0].mxu0
      %v1177 = vadd.f32 %v1011, %v1176
      %v1178 = vpop.f32.mrb[0].mxu0
      %v1179 = vpop.f32.mrb[0].mxu0
      %v1180 = vadd.f32 %v1016, %v1179
      %v1181 = vpop.f32.mrb[0].mxu0
      %1182 = vmatprep.mubr.bf16.mxu0 0
      %1183 = vmatmul.mubr.bf16.gmra.mrb[0].mxu0 %v1097
      %v1184 = vpop.f32.mrb[0].mxu0
      %v1185 = vadd.f32 %v1021, %v1184
      %v1186 = vpop.f32.mrb[0].mxu0
      %v1187 = vpop.f32.mrb[0].mxu0
      %v1188 = vadd.f32 %v1026, %v1187
      %v1189 = vpop.f32.mrb[0].mxu0
      %1190 = vmatprep.mubr.bf16.mxu0 0
      %1191 = vmatmul.mubr.bf16.gmra.mrb[0].mxu0 %v1100
      %v1192 = vpop.f32.mrb[0].mxu0
      %v1193 = vadd.f32 %v1031, %v1192
      %v1194 = vpop.f32.mrb[0].mxu0
      %v1195 = vpop.f32.mrb[0].mxu0
      %v1196 = vadd.f32 %v1036, %v1195
      %v1197 = vpop.f32.mrb[0].mxu0
      %1198 = vdwg.mxu0
      %v1199 = vmax.f32 %v1137, 0.0
      %v1200 = vmax.f32 %v1140, 0.0
      %v1201 = vmax.f32 %v1145, 0.0
      %v1202 = vmax.f32 %v1148, 0.0
      %v1203 = vmax.f32 %v1153, 0.0
      %v1204 = vmax.f32 %v1156, 0.0
      %v1205 = vmax.f32 %v1161, 0.0
      %v1206 = vmax.f32 %v1164, 0.0
      %v1207 = vmax.f32 %v1169, 0.0
      %v1208 = vmax.f32 %v1172, 0.0
      %v1209 = vmax.f32 %v1177, 0.0
      %v1210 = vmax.f32 %v1180, 0.0
      %v1211 = vmax.f32 %v1185, 0.0
      %v1212 = vmax.f32 %v1188, 0.0
      %v1213 = vmax.f32 %v1193, 0.0
      %v1214 = vmax.f32 %v1196, 0.0
      %v1215 = vpack.c.bf16 %v1200, %v1199
      %v1216 = vpack.c.bf16 %v1202, %v1201
      %v1217 = vpack.c.bf16 %v1204, %v1203
      %v1218 = vpack.c.bf16 %v1206, %v1205
      %v1219 = vpack.c.bf16 %v1208, %v1207
      %v1220 = vpack.c.bf16 %v1210, %v1209
      %v1221 = vpack.c.bf16 %v1212, %v1211
      %v1222 = vpack.c.bf16 %v1214, %v1213
      %v1223 = vld [vmem:[%s9] sm:$0xf]
      %v1224 = vld [vmem:[%s9 + $0x4] sm:$0xf]
      %v1225 = vld [vmem:[%s9 + $0x8] sm:$0xf]
      %v1226 = vld [vmem:[%s9 + $0xc] sm:$0xf]
      %v1227 = vld [vmem:[%s9 + $0x10] sm:$0xf]
      %v1228 = vld [vmem:[%s9 + $0x14] sm:$0xf]
      %v1229 = vld [vmem:[%s9 + $0x18] sm:$0xf]
      %v1230 = vld [vmem:[%s9 + $0x1c] sm:$0xf]
      %v1231 = vld [vmem:[%s10] sm:$0xff]
      %v1232 = vld [vmem:[%s10 + $0x8] sm:$0xff]
      %v1233 = vld [vmem:[%s10 + $0x10] sm:$0xff]
      %v1234 = vld [vmem:[%s10 + $0x18] sm:$0xff]
      %v1235 = vld [vmem:[%s10 + $0x20] sm:$0xff]
      %v1236 = vld [vmem:[%s10 + $0x28] sm:$0xff]
      %v1237 = vld [vmem:[%s10 + $0x30] sm:$0xff]
      %v1238 = vld [vmem:[%s10 + $0x38] sm:$0xff]
      %1240 = vset.pattern.permute.xlu0 0
      %1241 = vperm.xlu0 %1240, %v1231
      %v1242 = vpop.permute.xlu0 %1241
      %1245 = vset.pattern.permute.xlu0 0
      %1246 = vperm.xlu0 %1245, %v1232
      %v1247 = vpop.permute.xlu0 %1246
      %1250 = vset.pattern.permute.xlu0 0
      %1251 = vperm.xlu0 %1250, %v1233
      %v1252 = vpop.permute.xlu0 %1251
      %1255 = vset.pattern.permute.xlu0 0
      %1256 = vperm.xlu0 %1255, %v1234
      %v1257 = vpop.permute.xlu0 %1256
      %1260 = vset.pattern.permute.xlu0 0
      %1261 = vperm.xlu0 %1260, %v1235
      %v1262 = vpop.permute.xlu0 %1261
      %1265 = vset.pattern.permute.xlu0 0
      %1266 = vperm.xlu0 %1265, %v1236
      %v1267 = vpop.permute.xlu0 %1266
      %1270 = vset.pattern.permute.xlu0 0
      %1271 = vperm.xlu0 %1270, %v1237
      %v1272 = vpop.permute.xlu0 %1271
      %1275 = vset.pattern.permute.xlu0 0
      %1276 = vperm.xlu0 %1275, %v1238
      %v1277 = vpop.permute.xlu0 %1276
      %v1287 = vunpack.c.l.b16 %v1223
      %v1288 = vunpack.c.l.b16 %v1224
      %v1289 = vunpack.c.l.b16 %v1225
      %v1290 = vunpack.c.l.b16 %v1226
      %v1291 = vunpack.c.l.b16 %v1227
      %v1292 = vunpack.c.l.b16 %v1228
      %v1293 = vunpack.c.l.b16 %v1229
      %v1294 = vunpack.c.l.b16 %v1230
      %v1295 = vpack.c.b16 %v1288, %v1287
      %v1296 = vpack.c.b16 %v1290, %v1289
      %v1297 = vpack.c.b16 %v1292, %v1291
      %v1298 = vpack.c.b16 %v1294, %v1293
      %1303 = vmatprep.subr.bf16.mxu0 0
      %1304 = vmatpush1.bf16.msra.mxu0 %v1215
      %1305 = vmatprep.subr.bf16.mxu0 0
      %1306 = vmatpush1.bf16.msra.mxu0 %v1216
      %1307 = vmatprep.subr.bf16.mxu0 0
      %1308 = vmatpush1.bf16.msra.mxu0 %v1217
      %1309 = vmatprep.subr.bf16.mxu0 0
      %1310 = vmatpush1.bf16.msra.mxu0 %v1218
      %1311 = vmatprep.subr.bf16.mxu0 0
      %1312 = vmatpush1.bf16.msra.mxu0 %v1219
      %1313 = vmatprep.subr.bf16.mxu0 0
      %1314 = vmatpush1.bf16.msra.mxu0 %v1220
      %1315 = vmatprep.subr.bf16.mxu0 0
      %1316 = vmatpush1.bf16.msra.mxu0 %v1221
      %1317 = vmatprep.subr.bf16.mxu0 0
      %1318 = vmatpush1.bf16.msra.mxu0 %v1222
      %1319 = vmatprep.subr.bf16.mxu0 0
      %1320 = vmatpush1.bf16.msra.mxu0 0
      %1321 = vmatprep.subr.bf16.mxu0 0
      %1322 = vmatpush1.bf16.msra.mxu0 0
      %1323 = vmatprep.subr.bf16.mxu0 0
      %1324 = vmatpush1.bf16.msra.mxu0 0
      %1325 = vmatprep.subr.bf16.mxu0 0
      %1326 = vmatpush1.bf16.msra.mxu0 0
      %1327 = vmatprep.subr.bf16.mxu0 0
      %1328 = vmatpush1.bf16.msra.mxu0 0
      %1329 = vmatprep.subr.bf16.mxu0 0
      %1330 = vmatpush1.bf16.msra.mxu0 0
      %1331 = vmatprep.subr.bf16.mxu0 0
      %1332 = vmatpush1.bf16.msra.mxu0 0
      %1333 = vmatprep.subr.bf16.mxu0 0
      %1334 = vmatpush1.bf16.msra.mxu0 0
      %1335 = vmatprep.mubr.bf16.mxu0 0
      %1336 = vmatmul.mubr.bf16.gmra.mrb[0].mxu0 %v1295
      %v1337 = vpop.f32.mrb[0].mxu0
      %v1338 = vadd.f32 %v1242, %v1337
      %v1339 = vpop.f32.mrb[0].mxu0
      %v1340 = vpop.f32.mrb[0].mxu0
      %v1341 = vadd.f32 %v1247, %v1340
      %v1342 = vpop.f32.mrb[0].mxu0
      %1343 = vmatprep.mubr.bf16.mxu0 0
      %1344 = vmatmul.mubr.bf16.gmra.mrb[0].mxu0 %v1296
      %v1345 = vpop.f32.mrb[0].mxu0
      %v1346 = vadd.f32 %v1252, %v1345
      %v1347 = vpop.f32.mrb[0].mxu0
      %v1348 = vpop.f32.mrb[0].mxu0
      %v1349 = vadd.f32 %v1257, %v1348
      %v1350 = vpop.f32.mrb[0].mxu0
      %1351 = vmatprep.mubr.bf16.mxu0 0
      %1352 = vmatmul.mubr.bf16.gmra.mrb[0].mxu0 %v1297
      %v1353 = vpop.f32.mrb[0].mxu0
      %v1354 = vadd.f32 %v1262, %v1353
      %v1355 = vpop.f32.mrb[0].mxu0
      %v1356 = vpop.f32.mrb[0].mxu0
      %v1357 = vadd.f32 %v1267, %v1356
      %v1358 = vpop.f32.mrb[0].mxu0
      %1359 = vmatprep.mubr.bf16.mxu0 0
      %1360 = vmatmul.mubr.bf16.gmra.mrb[0].mxu0 %v1298
      %v1361 = vpop.f32.mrb[0].mxu0
      %v1362 = vadd.f32 %v1272, %v1361
      %v1363 = vpop.f32.mrb[0].mxu0
      %v1364 = vpop.f32.mrb[0].mxu0
      %v1365 = vadd.f32 %v1277, %v1364
      %v1366 = vpop.f32.mrb[0].mxu0
      %1367 = vdwg.mxu0
      %v1368 = vmax.f32 %v1338, 0.0
      %v1369 = vmax.f32 %v1341, 0.0
      %v1370 = vmax.f32 %v1346, 0.0
      %v1371 = vmax.f32 %v1349, 0.0
      %v1372 = vmax.f32 %v1354, 0.0
      %v1373 = vmax.f32 %v1357, 0.0
      %v1374 = vmax.f32 %v1362, 0.0
      %v1375 = vmax.f32 %v1365, 0.0
      %vm1376 = vcmask 130048
      %v1377 = vsel %vm1376, %v1368, -inf
      %1378 = vmax.xlane.f32.xlu0 %v1377
      %v1379 = vpop.xlane.xlu0 %1378
      %v1380 = vsel %vm1376, %v1369, -inf
      %1381 = vmax.xlane.f32.xlu0 %v1380
      %v1382 = vpop.xlane.xlu0 %1381
      %v1383 = vsel %vm1376, %v1370, -inf
      %1384 = vmax.xlane.f32.xlu0 %v1383
      %v1385 = vpop.xlane.xlu0 %1384
      %v1386 = vsel %vm1376, %v1371, -inf
      %1387 = vmax.xlane.f32.xlu0 %v1386
      %v1388 = vpop.xlane.xlu0 %1387
      %v1389 = vsel %vm1376, %v1372, -inf
      %1390 = vmax.xlane.f32.xlu0 %v1389
      %v1391 = vpop.xlane.xlu0 %1390
      %v1392 = vsel %vm1376, %v1373, -inf
      %1393 = vmax.xlane.f32.xlu0 %v1392
      %v1394 = vpop.xlane.xlu0 %1393
      %v1395 = vsel %vm1376, %v1374, -inf
      %1396 = vmax.xlane.f32.xlu0 %v1395
      %v1397 = vpop.xlane.xlu0 %1396
      %v1398 = vsel %vm1376, %v1375, -inf
      %1399 = vmax.xlane.f32.xlu0 %v1398
      %v1400 = vpop.xlane.xlu0 %1399
      %v1401 = vld [vmem:[%s406] sm:$0xff]
      %v1402 = vld [vmem:[%s406 + $0x8] sm:$0xff]
      %v1403 = vld [vmem:[%s406 + $0x10] sm:$0xff]
      %v1404 = vld [vmem:[%s406 + $0x18] sm:$0xff]
      %v1405 = vld [vmem:[%s406 + $0x20] sm:$0xff]
      %v1406 = vld [vmem:[%s406 + $0x28] sm:$0xff]
      %v1407 = vld [vmem:[%s406 + $0x30] sm:$0xff]
      %v1408 = vld [vmem:[%s406 + $0x38] sm:$0xff]
      %v1409 = vmax.f32 %v1401, %v1379
      %v1410 = vmax.f32 %v1402, %v1382
      %v1411 = vmax.f32 %v1403, %v1385
      %v1412 = vmax.f32 %v1404, %v1388
      %v1413 = vmax.f32 %v1405, %v1391
      %v1414 = vmax.f32 %v1406, %v1394
      %v1415 = vmax.f32 %v1407, %v1397
      %v1416 = vmax.f32 %v1408, %v1400
      %vm1417 = vcmask 7168
      %1418 = vst.msk [vmem:[%s406] sm:$0xff] %vm1417, %v1409
      %1419 = vst.msk [vmem:[%s406 + $0x8] sm:$0xff] %vm1417, %v1410
      %1420 = vst.msk [vmem:[%s406 + $0x10] sm:$0xff] %vm1417, %v1411
      %1421 = vst.msk [vmem:[%s406 + $0x18] sm:$0xff] %vm1417, %v1412
      %1422 = vst.msk [vmem:[%s406 + $0x20] sm:$0xff] %vm1417, %v1413
      %1423 = vst.msk [vmem:[%s406 + $0x28] sm:$0xff] %vm1417, %v1414
      %1424 = vst.msk [vmem:[%s406 + $0x30] sm:$0xff] %vm1417, %v1415
      %1425 = vst.msk [vmem:[%s406 + $0x38] sm:$0xff] %vm1417, %v1416
      %p1426 = scmp.lt.s32.totalorder %s26, 1
      %s1427 = scalar_select %p1426, %s26, 1
      %s1428 = smul.addr %s1427, 8
      %s1429 = smul.addr %s1428, 8
      %s1430 = scalar_lea.vmem %s11, %s1429
      // Predicated region
      $region69: #{pointnet_forward.2} parent=63 // pred_check
        %p1431 = pneg %p290
      $region70: #{pointnet_forward.2} parent=63 // pred_check_branch
        %1433 = sbr.rel (%p1431) target = $region72
      $region71: #{pointnet_forward.2} parent=63 // pred_region
        _
      $region72: #{pointnet_forward.2} parent=63 // pred_fallthru
        _
    $region64: #{pointnet_forward.2} parent=5 // pred_fallthru
      _
    %p1434 = scmp.le.s32.totalorder 2, %s17
    // Predicated region
    $region73: #{pointnet_forward.2} parent=5 // pred_check
      %p1435 = pneg %p1434
    $region74: #{pointnet_forward.2} parent=5 // pred_check_branch
      %1437 = sbr.rel (%p1435) target = $region76
    $region75: #{pointnet_forward.2} parent=5 // pred_region
      %s1438 = ssub.s32 %s17, 2
      // Predicated region
      $region77: #{pointnet_forward.2} parent=75 // pred_check
        %p1439 = pneg %p296
      $region78: #{pointnet_forward.2} parent=75 // pred_check_branch
        %1441 = sbr.rel (%p1439) target = $region80
      $region79: #{pointnet_forward.2} parent=75 // pred_region
        %p1442 = scmp.lt.s32.totalorder %s28, 1
        %s1443 = scalar_select %p1442, %s28, 1
        %s1444 = smul.addr %s1443, 8
        %s1445 = smul.addr %s1444, 8
        %s1446 = scalar_lea.vmem %s11, %s1445
      $region80: #{pointnet_forward.2} parent=75 // pred_fallthru
        _
    $region76: #{pointnet_forward.2} parent=5 // pred_fallthru
      _
  $region6: #{pointnet_forward.2} parent=0 // loop_footer
    %s21 = sadd.s32 1, %s17
  $region7: #{pointnet_forward.2} parent=0 // loop_footer_branch
    %16 = sbr.rel target = $region3
  $region8: #{pointnet_forward.2} parent=0 // loop_exit
    _

</llo_original>
